<compile_context>
chip_gen: v7x
topology: tpu7x:2x2x1
jax: 0.10.0
libtpu: 0.0.40
codegen_flags: <defaults>
</compile_context>

<pallas_src>
import functools

import jax
import jax.numpy as jnp
from jax import lax
from jax.experimental import pallas as pl
from jax.experimental.pallas import tpu as pltpu

C1 = 128      # conv1 channels padded 64 -> 128 (lane-dense h1)
C3 = 1024     # conv3 channels
LANE = 128
C3_CHUNK = 256   # layer-3 output-column chunk (bounds the live z3 slab)


def _round_up(x, m):
    return (x + m - 1) // m * m


# ----------------------------------------------------------------------------
# Kernel 1: per-point MLP d -> 128(pad of 64) -> 128 -> 1024 (+folded BN,
#           ReLU) with a running max over the tiled point dimension.
#           grid = (B, n_splits, tiles_per_split); bias3 + ReLU applied once
#           in the finalize step.
# ----------------------------------------------------------------------------
def point_feat_kernel(x_ref, w1_ref, b1_ref, w2_ref, b2_ref, w3_ref, b3_ref,
                      out_ref, acc_ref, *, n_valid, tile_n, tiles_per_split,
                      first_padded_tile):
    s = pl.program_id(1)
    nk = pl.program_id(2)

    @pl.when(nk == 0)
    def _():
        acc_ref[...] = jnp.full(acc_ref.shape, -jnp.inf, dtype=acc_ref.dtype)

    x = x_ref[0]                                                  # (TILE, d) bf16
    h1 = jnp.maximum(
        jnp.dot(x, w1_ref[...], preferred_element_type=jnp.float32)
        + b1_ref[...], 0.0)                                       # (TILE, 128) f32
    h2 = jnp.maximum(
        jnp.dot(h1.astype(jnp.bfloat16), w2_ref[...],
                preferred_element_type=jnp.float32)
        + b2_ref[...], 0.0)                                       # (TILE, 128) f32
    h2b = h2.astype(jnp.bfloat16)

    has_pad = first_padded_tile is not None
    if has_pad:
        nk_global = s * tiles_per_split + nk
        is_padded_tile = nk_global >= first_padded_tile
        row = lax.broadcasted_iota(jnp.int32, (tile_n, 1), 0)
        valid = (nk_global * tile_n + row) < n_valid              # (TILE, 1)

    # Layer 3: raw z3 (no bias, no ReLU here) chunked over output columns,
    # folded into the running max.
    for c in range(C3 // C3_CHUNK):
        c0 = c * C3_CHUNK
        z = jnp.dot(h2b, w3_ref[:, c0:c0 + C3_CHUNK],
                    preferred_element_type=jnp.float32)           # (TILE, 256) f32

        if has_pad:
            @pl.when(is_padded_tile)
            def _(z=z, c0=c0):
                zm = jnp.where(valid, z, -jnp.inf)
                acc_ref[:, c0:c0 + C3_CHUNK] = jnp.maximum(
                    acc_ref[:, c0:c0 + C3_CHUNK],
                    jnp.max(zm, axis=0, keepdims=True))

            @pl.when(jnp.logical_not(is_padded_tile))
            def _(z=z, c0=c0):
                acc_ref[:, c0:c0 + C3_CHUNK] = jnp.maximum(
                    acc_ref[:, c0:c0 + C3_CHUNK],
                    jnp.max(z, axis=0, keepdims=True))
        else:
            acc_ref[:, c0:c0 + C3_CHUNK] = jnp.maximum(
                acc_ref[:, c0:c0 + C3_CHUNK],
                jnp.max(z, axis=0, keepdims=True))

    @pl.when(nk == pl.num_programs(2) - 1)
    def _():
        # Hoisted bias + ReLU: relu(max_n z3 + b3) == max_n relu(z3 + b3).
        out_ref[0] = jnp.maximum(acc_ref[...] + b3_ref[...], 0.0)


# ----------------------------------------------------------------------------
# Kernel 2: FC head 1024 -> 512 -> 256 -> pad(d*d, 128); BN, fc biases and
#           the eye(d) addition are all folded into the bias vectors.
#           grid over B tiles ("parallel").
# ----------------------------------------------------------------------------
def head_kernel(g_ref, w4_ref, b4_ref, w5_ref, b5_ref, w6_ref, b6_ref,
                out_ref):
    g = g_ref[...]                                                # (TB, 1024) bf16
    h4 = jnp.maximum(
        jnp.dot(g, w4_ref[...], preferred_element_type=jnp.float32)
        + b4_ref[...], 0.0)                                       # (TB, 512) f32
    h5 = jnp.maximum(
        jnp.dot(h4.astype(jnp.bfloat16), w5_ref[...],
                preferred_element_type=jnp.float32)
        + b5_ref[...], 0.0)                                       # (TB, 256) f32
    out_ref[...] = (
        jnp.dot(h5.astype(jnp.bfloat16), w6_ref[...],
                preferred_element_type=jnp.float32)
        + b6_ref[...])                                            # (TB, out_pad) f32


# ----------------------------------------------------------------------------
# Parameter folding (eval-mode BN -> weights), lane padding, bf16 cast
# ----------------------------------------------------------------------------
def fold_bn(gamma, beta, mean, var, eps=1e-5):
    scale = gamma / jnp.sqrt(var + eps)
    bias = beta - mean * scale
    return scale, bias


def prepare_folded_params(params, d_model):
    s1, b1 = fold_bn(*params["bn1"])
    s2, b2 = fold_bn(*params["bn2"])
    s3, b3 = fold_bn(*params["bn3"])
    s4, b4 = fold_bn(*params["bn4"])
    s5, b5 = fold_bn(*params["bn5"])

    def pad_cols(a, to):
        return jnp.pad(a, ((0, 0), (0, to - a.shape[1])))

    def pad_rows(a, to):
        return jnp.pad(a, ((0, to - a.shape[0]), (0, 0)))

    # conv1/2/3 (no conv bias): (x @ w) * s + b  ==  x @ (w * s) + b
    w1 = pad_cols(params["w1"] * s1[None, :], C1).astype(jnp.bfloat16)
    b1v = jnp.pad(b1, (0, C1 - b1.shape[0]))[None, :].astype(jnp.float32)
    w2 = pad_rows(params["w2"] * s2[None, :], C1).astype(jnp.bfloat16)
    b2v = b2[None, :].astype(jnp.float32)
    w3 = (params["w3"] * s3[None, :]).astype(jnp.bfloat16)
    b3v = b3[None, :].astype(jnp.float32)

    # fc1/fc2: (g @ w + c) * s + b  ==  g @ (w * s) + (c * s + b)
    w4 = (params["w4"] * s4[None, :]).astype(jnp.bfloat16)
    b4v = (params["c4"] * s4 + b4)[None, :].astype(jnp.float32)
    w5 = (params["w5"] * s5[None, :]).astype(jnp.bfloat16)
    b5v = (params["c5"] * s5 + b5)[None, :].astype(jnp.float32)

    # fc3 + eye: h @ w6 + (c6 + eye_flat), lane-padded to 128 wide
    dd = d_model * d_model
    out_pad = _round_up(dd, LANE)
    eye_flat = jnp.eye(d_model, dtype=jnp.float32).reshape(dd)
    w6 = pad_cols(params["w6"], out_pad).astype(jnp.bfloat16)
    b6v = jnp.pad(params["c6"] + eye_flat,
                  (0, out_pad - dd))[None, :].astype(jnp.float32)

    return dict(w1=w1, b1=b1v, w2=w2, b2=b2v, w3=w3, b3=b3v,
                w4=w4, b4=b4v, w5=w5, b5=b5v, w6=w6, b6=b6v,
                out_pad=out_pad)


# ----------------------------------------------------------------------------
# Wrapper
# ----------------------------------------------------------------------------
def stn_forward(x_ncl, params, d_model, *, tile_n=2048):
    """x_ncl: (B, d_model, N) — same layout as the PyTorch Conv1d input."""
    B, _, N = x_ncl.shape
    fp = prepare_folded_params(params, d_model)

    # Channels-last + bf16 (transpose fuses with the dtype convert in XLA).
    # TODO(synk): for very large inputs, contract the channel axis of the NCL
    # layout directly inside the kernel to save this HBM pass over x.
    x = jnp.transpose(x_ncl, (0, 2, 1)).astype(jnp.bfloat16)      # (B, N, d)

    tile_n = min(tile_n, _round_up(N, 8))
    n_tiles_raw = pl.cdiv(N, tile_n)
    # Split the N-tile range across a second "parallel" axis so both v7x
    # TensorCores are used when B == 1 (one TC per (b, split)).
    n_splits = 2 if (B == 1 and n_tiles_raw >= 2) else 1
    tiles_per_split = pl.cdiv(n_tiles_raw, n_splits)
    n_pad = tiles_per_split * n_splits * tile_n
    if n_pad != N:
        x = jnp.pad(x, ((0, 0), (0, n_pad - N), (0, 0)))

    first_padded_tile = (N // tile_n) if (n_pad != N) else None

    const2d = lambda a: pl.BlockSpec(a.shape, lambda b, s, nk: (0, 0))
    x_map = lambda b, s, nk, tps=tiles_per_split: (b, s * tps + nk, 0)

    kernel1 = functools.partial(
        point_feat_kernel, n_valid=N, tile_n=tile_n,
        tiles_per_split=tiles_per_split, first_padded_tile=first_padded_tile)

    gfeat = pl.pallas_call(
        kernel1,
        out_shape=jax.ShapeDtypeStruct((B, n_splits, C3), jnp.float32),
        grid_spec=pltpu.PrefetchScalarGridSpec(
            num_scalar_prefetch=0,
            grid=(B, n_splits, tiles_per_split),
            in_specs=[
                pl.BlockSpec((1, tile_n, d_model), x_map),
                const2d(fp["w1"]), const2d(fp["b1"]),
                const2d(fp["w2"]), const2d(fp["b2"]),
                const2d(fp["w3"]), const2d(fp["b3"]),
            ],
            out_specs=pl.BlockSpec((1, 1, C3), lambda b, s, nk: (b, s, 0)),
            scratch_shapes=[pltpu.VMEM((1, C3), jnp.float32)],
        ),
        compiler_params=pltpu.CompilerParams(
            dimension_semantics=("parallel", "parallel", "arbitrary"),
            vmem_limit_bytes=32 * 1024 * 1024),
    )(x, fp["w1"], fp["b1"], fp["w2"], fp["b2"], fp["w3"], fp["b3"])

    # Combine per-split partial results (bit-exact: relu(.+b3) is monotone,
    # so max over splits of finalized values equals finalize of the max).
    g = jnp.max(gfeat, axis=1).astype(jnp.bfloat16)               # (B, 1024)

    # ---- FC head, tiled over B ----
    tile_b = min(B, 256)
    b_pad = _round_up(B, tile_b)
    g_in = g if b_pad == B else jnp.pad(g, ((0, b_pad - B), (0, 0)))

    const1 = lambda a: pl.BlockSpec(a.shape, lambda i: (0,) * a.ndim)
    out_pad = fp["out_pad"]
    out_padded = pl.pallas_call(
        head_kernel,
        out_shape=jax.ShapeDtypeStruct((b_pad, out_pad), jnp.float32),
        grid_spec=pltpu.PrefetchScalarGridSpec(
            num_scalar_prefetch=0,
            grid=(b_pad // tile_b,),
            in_specs=[
                pl.BlockSpec((tile_b, C3), lambda i: (i, 0)),
                const1(fp["w4"]), const1(fp["b4"]),
                const1(fp["w5"]), const1(fp["b5"]),
                const1(fp["w6"]), const1(fp["b6"]),
            ],
            out_specs=pl.BlockSpec((tile_b, out_pad), lambda i: (i, 0)),
        ),
        compiler_params=pltpu.CompilerParams(
            dimension_semantics=("parallel",)),
    )(g_in, fp["w4"], fp["b4"], fp["w5"], fp["b5"], fp["w6"], fp["b6"])

    dd = d_model * d_model
    return out_padded[:B, :dd].reshape(B, d_model, d_model)


# ----------------------------------------------------------------------------
# References
# ----------------------------------------------------------------------------
def stn_reference_folded(x_ncl, params, d_model):
    """Identical math to the kernels (folded BN, bf16 operands, f32 acc)."""
    fp = prepare_folded_params(params, d_model)
    x = jnp.transpose(x_ncl, (0, 2, 1)).astype(jnp.bfloat16)
    f32 = jnp.float32
    h = jnp.maximum(jnp.dot(x, fp["w1"], preferred_element_type=f32) + fp["b1"], 0.0)
    h = jnp.maximum(jnp.dot(h.astype(jnp.bfloat16), fp["w2"],
                            preferred_element_type=f32) + fp["b2"], 0.0)
    h = jnp.maximum(jnp.dot(h.astype(jnp.bfloat16), fp["w3"],
                            preferred_element_type=f32) + fp["b3"], 0.0)
    g = jnp.max(h, axis=1).astype(jnp.bfloat16)
    h = jnp.maximum(jnp.dot(g, fp["w4"], preferred_element_type=f32) + fp["b4"], 0.0)
    h = jnp.maximum(jnp.dot(h.astype(jnp.bfloat16), fp["w5"],
                            preferred_element_type=f32) + fp["b5"], 0.0)
    o = jnp.dot(h.astype(jnp.bfloat16), fp["w6"],
                preferred_element_type=f32) + fp["b6"]
    dd = d_model * d_model
    return o[:, :dd].reshape(-1, d_model, d_model)


def stn_reference_f32(x_ncl, params, d_model):
    """Pure f32 eval-mode module math (the PyTorch forward)."""
    x = jnp.transpose(x_ncl, (0, 2, 1)).astype(jnp.float32)
    s1, b1 = fold_bn(*params["bn1"]); s2, b2 = fold_bn(*params["bn2"])
    s3, b3 = fold_bn(*params["bn3"]); s4, b4 = fold_bn(*params["bn4"])
    s5, b5 = fold_bn(*params["bn5"])
    h = jnp.maximum((x @ params["w1"]) * s1 + b1, 0.0)
    h = jnp.maximum((h @ params["w2"]) * s2 + b2, 0.0)
    h = jnp.maximum((h @ params["w3"]) * s3 + b3, 0.0)
    g = jnp.max(h, axis=1)
    h = jnp.maximum((g @ params["w4"] + params["c4"]) * s4 + b4, 0.0)
    h = jnp.maximum((h @ params["w5"] + params["c5"]) * s5 + b5, 0.0)
    o = h @ params["w6"] + params["c6"]
    return o.reshape(-1, d_model, d_model) + jnp.eye(d_model, dtype=jnp.float32)


def make_params(d_model, key):
    keys = jax.random.split(key, 6)

    def bn(c):
        i = jnp.arange(c, dtype=jnp.float32)
        gamma = 1.0 + 0.1 * jnp.cos(0.1 * i)
        beta = 0.1 * jnp.sin(0.1 * i)
        mean = 0.05 * jnp.sin(0.3 * i)
        var = 1.0 + 0.1 * jnp.cos(0.2 * i) ** 2
        return (gamma, beta, mean, var)

    return {
        # conv/fc weights stored transposed: (in, out)
        "w1": jax.random.normal(keys[0], (d_model, 64), jnp.float32) * 0.1,
        "w2": jax.random.normal(keys[1], (64, 128), jnp.float32) * 0.1,
        "w3": jax.random.normal(keys[2], (128, 1024), jnp.float32) * 0.05,
        "w4": jax.random.normal(keys[3], (1024, 512), jnp.float32) * 0.03,
        "c4": 0.01 * jnp.sin(jnp.arange(512, dtype=jnp.float32)),
        "w5": jax.random.normal(keys[4], (512, 256), jnp.float32) * 0.05,
        "c5": 0.01 * jnp.sin(jnp.arange(256, dtype=jnp.float32)),
        "w6": jax.random.normal(keys[5], (256, d_model * d_model),
                                jnp.float32) * 0.05,
        "c6": 0.01 * jnp.sin(jnp.arange(d_model * d_model, dtype=jnp.float32)),
        "bn1": bn(64), "bn2": bn(128), "bn3": bn(1024),
        "bn4": bn(512), "bn5": bn(256),
    }


if __name__ == "__main__":
    def run_case(B, d_model, N, seed):
        key = jax.random.PRNGKey(seed)
        kx, kp = jax.random.split(key)
        # PyTorch Conv1d layout: (B, C=d_model, L=N)
        x = jax.random.normal(kx, (B, d_model, N), jnp.float32)
        params = make_params(d_model, kp)

        y = jax.block_until_ready(stn_forward(x, params, d_model))
        assert y.shape == (B, d_model, d_model)

        # Tight check: same folded/bf16 math run through plain JAX.
        y_match = stn_reference_folded(x, params, d_model)
        assert jnp.allclose(y, y_match, rtol=1e-2, atol=1e-2), \
            "kernel mismatch vs matched (folded bf16) reference"

        # Loose sanity check: bf16 kernel vs full-f32 module math.
        y_f32 = stn_reference_f32(x, params, d_model)
        scale = jnp.maximum(1.0, jnp.max(jnp.abs(y_f32)))
        rel = jnp.max(jnp.abs(y - y_f32)) / scale
        assert float(rel) < 5e-2, f"bf16 drift vs f32 reference: {float(rel)}"

    # Small shape (toy, matches the module spec defaults).
    run_case(B=2, d_model=4, N=16, seed=0)
    # Realistic PointNet-ish shape: exercises N-tiling + last-tile masking.
    run_case(B=2, d_model=3, N=2500, seed=1)
    # B=1: exercises the dual-core split axis (n_splits=2) + partial tile.
    run_case(B=1, d_model=3, N=2500, seed=2)

    print("KERNEL_OK")
</pallas_src>

<mosaic_0001>
module attributes {stable_mosaic.version = 11 : i64} {
  func.func @point_feat_kernel(%arg0: i32, %arg1: i32, %arg2: i32, %arg3: memref<1x16x4xbf16, #tpu.memory_space<vmem>>, %arg4: memref<4x128xbf16, #tpu.memory_space<vmem>>, %arg5: memref<1x128xf32, #tpu.memory_space<vmem>>, %arg6: memref<128x128xbf16, #tpu.memory_space<vmem>>, %arg7: memref<1x128xf32, #tpu.memory_space<vmem>>, %arg8: memref<128x1024xbf16, #tpu.memory_space<vmem>>, %arg9: memref<1x1024xf32, #tpu.memory_space<vmem>>, %arg10: memref<1x1x1024xf32, #tpu.memory_space<vmem>>, %arg11: memref<1x1024xf32, #tpu.memory_space<vmem>>) attributes {dimension_semantics = [#tpu.dimension_semantics<parallel>, #tpu.dimension_semantics<parallel>, #tpu.dimension_semantics<arbitrary>], iteration_bounds = array<i64: 2, 1, 1>, scalar_prefetch = 0 : i64, scratch_operands = 1 : i64, tpu.core_type = #tpu.core_type<tc>, window_params = [{transform_indices = @transform_0, window_bounds = array<i64: 1, 16, 4>}, {pipeline_mode = #tpu.pipeline_mode<synchronous>, transform_indices = @transform_1, window_bounds = array<i64: 4, 128>}, {pipeline_mode = #tpu.pipeline_mode<synchronous>, transform_indices = @transform_2, window_bounds = array<i64: 1, 128>}, {pipeline_mode = #tpu.pipeline_mode<synchronous>, transform_indices = @transform_3, window_bounds = array<i64: 128, 128>}, {pipeline_mode = #tpu.pipeline_mode<synchronous>, transform_indices = @transform_4, window_bounds = array<i64: 1, 128>}, {pipeline_mode = #tpu.pipeline_mode<synchronous>, transform_indices = @transform_5, window_bounds = array<i64: 128, 1024>}, {pipeline_mode = #tpu.pipeline_mode<synchronous>, transform_indices = @transform_6, window_bounds = array<i64: 1, 1024>}, {transform_indices = @transform_7, window_bounds = array<i64: 1, 1, 1024>}]} {
    %c0_i32 = arith.constant 0 : i32
    %0 = arith.cmpi eq, %arg2, %c0_i32 : i32
    %1 = arith.extui %0 : i1 to i32
    %c0_i32_0 = arith.constant 0 : i32
    %2 = arith.cmpi ne, %1, %c0_i32_0 : i32
    scf.if %2 {
      %cst_45 = arith.constant 0xFF800000 : f32
      %52 = vector.broadcast %cst_45 : f32 to vector<1x1024xf32>
      %c0_46 = arith.constant 0 : index
      %c0_47 = arith.constant 0 : index
      %53 = vector.load %arg11[%c0_46, %c0_47] : memref<1x1024xf32, #tpu.memory_space<vmem>>, vector<1x1024xf32>
      tpu.vector_store %arg11[%c0_46, %c0_47], %52 {strides = array<i32>} : memref<1x1024xf32, #tpu.memory_space<vmem>>, vector<1x1024xf32>,
    } else {
    }
    %c0 = arith.constant 0 : index
    %c0_1 = arith.constant 0 : index
    %c0_2 = arith.constant 0 : index
    %3 = vector.load %arg3[%c0, %c0_1, %c0_2] : memref<1x16x4xbf16, #tpu.memory_space<vmem>>, vector<1x16x4xbf16>
    %4 = vector.shape_cast %3 : vector<1x16x4xbf16> to vector<16x4xbf16>
    %c0_3 = arith.constant 0 : index
    %c0_4 = arith.constant 0 : index
    %5 = vector.load %arg4[%c0_3, %c0_4] : memref<4x128xbf16, #tpu.memory_space<vmem>>, vector<4x128xbf16>
    %cst = arith.constant dense<0.000000e+00> : vector<16x128xf32>
    %6 = tpu.matmul %4, %5, %cst {dimension_numbers = #tpu.dot_dimension_numbers<[1], [0], [0], [1], [0, 0, 1, 1], [], []>} : vector<16x4xbf16>, vector<4x128xbf16>, vector<16x128xf32> -> vector<16x128xf32>
    %c0_5 = arith.constant 0 : index
    %c0_6 = arith.constant 0 : index
    %7 = vector.load %arg5[%c0_5, %c0_6] : memref<1x128xf32, #tpu.memory_space<vmem>>, vector<1x128xf32>
    %8 = vector.broadcast %7 : vector<1x128xf32> to vector<16x128xf32>
    %9 = arith.addf %6, %8 : vector<16x128xf32>
    %cst_7 = arith.constant 0.000000e+00 : f32
    %10 = vector.broadcast %cst_7 : f32 to vector<16x128xf32>
    %11 = arith.maximumf %9, %10 : vector<16x128xf32>
    %12 = arith.truncf %11 : vector<16x128xf32> to vector<16x128xbf16>
    %c0_8 = arith.constant 0 : index
    %c0_9 = arith.constant 0 : index
    %13 = vector.load %arg6[%c0_8, %c0_9] : memref<128x128xbf16, #tpu.memory_space<vmem>>, vector<128x128xbf16>
    %cst_10 = arith.constant dense<0.000000e+00> : vector<16x128xf32>
    %14 = tpu.matmul %12, %13, %cst_10 {dimension_numbers = #tpu.dot_dimension_numbers<[1], [0], [0], [1], [0, 0, 1, 1], [], []>} : vector<16x128xbf16>, vector<128x128xbf16>, vector<16x128xf32> -> vector<16x128xf32>
    %c0_11 = arith.constant 0 : index
    %c0_12 = arith.constant 0 : index
    %15 = vector.load %arg7[%c0_11, %c0_12] : memref<1x128xf32, #tpu.memory_space<vmem>>, vector<1x128xf32>
    %16 = vector.broadcast %15 : vector<1x128xf32> to vector<16x128xf32>
    %17 = arith.addf %14, %16 : vector<16x128xf32>
    %cst_13 = arith.constant 0.000000e+00 : f32
    %18 = vector.broadcast %cst_13 : f32 to vector<16x128xf32>
    %19 = arith.maximumf %17, %18 : vector<16x128xf32>
    %20 = arith.truncf %19 : vector<16x128xf32> to vector<16x128xbf16>
    %c0_14 = arith.constant 0 : index
    %c0_15 = arith.constant 0 : index
    %21 = vector.load %arg8[%c0_14, %c0_15] : memref<128x1024xbf16, #tpu.memory_space<vmem>>, vector<128x256xbf16>
    %cst_16 = arith.constant dense<0.000000e+00> : vector<16x256xf32>
    %22 = tpu.matmul %20, %21, %cst_16 {dimension_numbers = #tpu.dot_dimension_numbers<[1], [0], [0], [1], [0, 0, 1, 1], [], []>} : vector<16x128xbf16>, vector<128x256xbf16>, vector<16x256xf32> -> vector<16x256xf32>
    %c0_17 = arith.constant 0 : index
    %c0_18 = arith.constant 0 : index
    %23 = vector.load %arg11[%c0_17, %c0_18] : memref<1x1024xf32, #tpu.memory_space<vmem>>, vector<1x256xf32>
    %cst_19 = arith.constant dense<0xFF800000> : vector<256xf32>
    %24 = vector.multi_reduction <maximumf>, %22, %cst_19 [0] : vector<16x256xf32> to vector<256xf32>
    %25 = vector.shape_cast %24 : vector<256xf32> to vector<1x256xf32>
    %26 = arith.maximumf %23, %25 : vector<1x256xf32>
    %c0_20 = arith.constant 0 : index
    %c0_21 = arith.constant 0 : index
    %27 = vector.load %arg11[%c0_20, %c0_21] : memref<1x1024xf32, #tpu.memory_space<vmem>>, vector<1x256xf32>
    tpu.vector_store %arg11[%c0_20, %c0_21], %26 {strides = array<i32>} : memref<1x1024xf32, #tpu.memory_space<vmem>>, vector<1x256xf32>,
    %c0_22 = arith.constant 0 : index
    %c256 = arith.constant 256 : index
    %28 = vector.load %arg8[%c0_22, %c256] : memref<128x1024xbf16, #tpu.memory_space<vmem>>, vector<128x256xbf16>
    %cst_23 = arith.constant dense<0.000000e+00> : vector<16x256xf32>
    %29 = tpu.matmul %20, %28, %cst_23 {dimension_numbers = #tpu.dot_dimension_numbers<[1], [0], [0], [1], [0, 0, 1, 1], [], []>} : vector<16x128xbf16>, vector<128x256xbf16>, vector<16x256xf32> -> vector<16x256xf32>
    %c0_24 = arith.constant 0 : index
    %c256_25 = arith.constant 256 : index
    %30 = vector.load %arg11[%c0_24, %c256_25] : memref<1x1024xf32, #tpu.memory_space<vmem>>, vector<1x256xf32>
    %cst_26 = arith.constant dense<0xFF800000> : vector<256xf32>
    %31 = vector.multi_reduction <maximumf>, %29, %cst_26 [0] : vector<16x256xf32> to vector<256xf32>
    %32 = vector.shape_cast %31 : vector<256xf32> to vector<1x256xf32>
    %33 = arith.maximumf %30, %32 : vector<1x256xf32>
    %c0_27 = arith.constant 0 : index
    %c256_28 = arith.constant 256 : index
    %34 = vector.load %arg11[%c0_27, %c256_28] : memref<1x1024xf32, #tpu.memory_space<vmem>>, vector<1x256xf32>
    tpu.vector_store %arg11[%c0_27, %c256_28], %33 {strides = array<i32>} : memref<1x1024xf32, #tpu.memory_space<vmem>>, vector<1x256xf32>,
    %c0_29 = arith.constant 0 : index
    %c512 = arith.constant 512 : index
    %35 = vector.load %arg8[%c0_29, %c512] : memref<128x1024xbf16, #tpu.memory_space<vmem>>, vector<128x256xbf16>
    %cst_30 = arith.constant dense<0.000000e+00> : vector<16x256xf32>
    %36 = tpu.matmul %20, %35, %cst_30 {dimension_numbers = #tpu.dot_dimension_numbers<[1], [0], [0], [1], [0, 0, 1, 1], [], []>} : vector<16x128xbf16>, vector<128x256xbf16>, vector<16x256xf32> -> vector<16x256xf32>
    %c0_31 = arith.constant 0 : index
    %c512_32 = arith.constant 512 : index
    %37 = vector.load %arg11[%c0_31, %c512_32] : memref<1x1024xf32, #tpu.memory_space<vmem>>, vector<1x256xf32>
    %cst_33 = arith.constant dense<0xFF800000> : vector<256xf32>
    %38 = vector.multi_reduction <maximumf>, %36, %cst_33 [0] : vector<16x256xf32> to vector<256xf32>
    %39 = vector.shape_cast %38 : vector<256xf32> to vector<1x256xf32>
    %40 = arith.maximumf %37, %39 : vector<1x256xf32>
    %c0_34 = arith.constant 0 : index
    %c512_35 = arith.constant 512 : index
    %41 = vector.load %arg11[%c0_34, %c512_35] : memref<1x1024xf32, #tpu.memory_space<vmem>>, vector<1x256xf32>
    tpu.vector_store %arg11[%c0_34, %c512_35], %40 {strides = array<i32>} : memref<1x1024xf32, #tpu.memory_space<vmem>>, vector<1x256xf32>,
    %c0_36 = arith.constant 0 : index
    %c768 = arith.constant 768 : index
    %42 = vector.load %arg8[%c0_36, %c768] : memref<128x1024xbf16, #tpu.memory_space<vmem>>, vector<128x256xbf16>
    %cst_37 = arith.constant dense<0.000000e+00> : vector<16x256xf32>
    %43 = tpu.matmul %20, %42, %cst_37 {dimension_numbers = #tpu.dot_dimension_numbers<[1], [0], [0], [1], [0, 0, 1, 1], [], []>} : vector<16x128xbf16>, vector<128x256xbf16>, vector<16x256xf32> -> vector<16x256xf32>
    %c0_38 = arith.constant 0 : index
    %c768_39 = arith.constant 768 : index
    %44 = vector.load %arg11[%c0_38, %c768_39] : memref<1x1024xf32, #tpu.memory_space<vmem>>, vector<1x256xf32>
    %cst_40 = arith.constant dense<0xFF800000> : vector<256xf32>
    %45 = vector.multi_reduction <maximumf>, %43, %cst_40 [0] : vector<16x256xf32> to vector<256xf32>
    %46 = vector.shape_cast %45 : vector<256xf32> to vector<1x256xf32>
    %47 = arith.maximumf %44, %46 : vector<1x256xf32>
    %c0_41 = arith.constant 0 : index
    %c768_42 = arith.constant 768 : index
    %48 = vector.load %arg11[%c0_41, %c768_42] : memref<1x1024xf32, #tpu.memory_space<vmem>>, vector<1x256xf32>
    tpu.vector_store %arg11[%c0_41, %c768_42], %47 {strides = array<i32>} : memref<1x1024xf32, #tpu.memory_space<vmem>>, vector<1x256xf32>,
    %c0_i32_43 = arith.constant 0 : i32
    %49 = arith.cmpi eq, %arg2, %c0_i32_43 : i32
    %50 = arith.extui %49 : i1 to i32
    %c0_i32_44 = arith.constant 0 : i32
    %51 = arith.cmpi ne, %50, %c0_i32_44 : i32
    scf.if %51 {
      %c0_45 = arith.constant 0 : index
      %c0_46 = arith.constant 0 : index
      %52 = vector.load %arg11[%c0_45, %c0_46] : memref<1x1024xf32, #tpu.memory_space<vmem>>, vector<1x1024xf32>
      %c0_47 = arith.constant 0 : index
      %c0_48 = arith.constant 0 : index
      %53 = vector.load %arg9[%c0_47, %c0_48] : memref<1x1024xf32, #tpu.memory_space<vmem>>, vector<1x1024xf32>
      %54 = arith.addf %52, %53 : vector<1x1024xf32>
      %cst_49 = arith.constant 0.000000e+00 : f32
      %55 = vector.broadcast %cst_49 : f32 to vector<1x1024xf32>
      %56 = arith.maximumf %54, %55 : vector<1x1024xf32>
      %c0_50 = arith.constant 0 : index
      %c0_51 = arith.constant 0 : index
      %c0_52 = arith.constant 0 : index
      %57 = vector.load %arg10[%c0_50, %c0_51, %c0_52] : memref<1x1x1024xf32, #tpu.memory_space<vmem>>, vector<1x1x1024xf32>
      %58 = vector.shape_cast %57 : vector<1x1x1024xf32> to vector<1x1024xf32>
      %59 = vector.shape_cast %56 : vector<1x1024xf32> to vector<1x1x1024xf32>
      tpu.vector_store %arg10[%c0_50, %c0_51, %c0_52], %59 {strides = array<i32>} : memref<1x1x1024xf32, #tpu.memory_space<vmem>>, vector<1x1x1024xf32>,
    } else {
    }
    return
  }
  func.func @transform_0(%arg0: i32, %arg1: i32, %arg2: i32) -> (i32, i32, i32) {
    %c1_i32 = arith.constant 1 : i32
    %0 = arith.muli %arg1, %c1_i32 : i32
    %1 = arith.addi %0, %arg2 : i32
    %c0_i32 = arith.constant 0 : i32
    %c0_i32_0 = arith.constant 0 : i32
    return %arg0, %1, %c0_i32 : i32, i32, i32
  }
  func.func @transform_1(%arg0: i32, %arg1: i32, %arg2: i32) -> (i32, i32) {
    %c0_i32 = arith.constant 0 : i32
    %c0_i32_0 = arith.constant 0 : i32
    %c0_i32_1 = arith.constant 0 : i32
    return %c0_i32, %c0_i32_0 : i32, i32
  }
  func.func @transform_2(%arg0: i32, %arg1: i32, %arg2: i32) -> (i32, i32) {
    %c0_i32 = arith.constant 0 : i32
    %c0_i32_0 = arith.constant 0 : i32
    %c0_i32_1 = arith.constant 0 : i32
    return %c0_i32, %c0_i32_0 : i32, i32
  }
  func.func @transform_3(%arg0: i32, %arg1: i32, %arg2: i32) -> (i32, i32) {
    %c0_i32 = arith.constant 0 : i32
    %c0_i32_0 = arith.constant 0 : i32
    %c0_i32_1 = arith.constant 0 : i32
    return %c0_i32, %c0_i32_0 : i32, i32
  }
  func.func @transform_4(%arg0: i32, %arg1: i32, %arg2: i32) -> (i32, i32) {
    %c0_i32 = arith.constant 0 : i32
    %c0_i32_0 = arith.constant 0 : i32
    %c0_i32_1 = arith.constant 0 : i32
    return %c0_i32, %c0_i32_0 : i32, i32
  }
  func.func @transform_5(%arg0: i32, %arg1: i32, %arg2: i32) -> (i32, i32) {
    %c0_i32 = arith.constant 0 : i32
    %c0_i32_0 = arith.constant 0 : i32
    %c0_i32_1 = arith.constant 0 : i32
    return %c0_i32, %c0_i32_0 : i32, i32
  }
  func.func @transform_6(%arg0: i32, %arg1: i32, %arg2: i32) -> (i32, i32) {
    %c0_i32 = arith.constant 0 : i32
    %c0_i32_0 = arith.constant 0 : i32
    %c0_i32_1 = arith.constant 0 : i32
    return %c0_i32, %c0_i32_0 : i32, i32
  }
  func.func @transform_7(%arg0: i32, %arg1: i32, %arg2: i32) -> (i32, i32, i32) {
    %c0_i32 = arith.constant 0 : i32
    %c0_i32_0 = arith.constant 0 : i32
    return %arg0, %arg1, %c0_i32 : i32, i32, i32
  }
}

</mosaic_0001>

<llo_original>
// kernel: tpu_custom_call.1
$region0: #{tpu_custom_call.1}
  #allocation0 [shape = 'u32[]', space=smem, size = 0x4, offset = 0x4, fixed_abs, tag = 'smem constant byte address 0x4 - core index']
  #allocation1 [shape = 'u32[144,128]{1,0:T(1,128)}', space=vmem, size = 0x12000, scoped, tag = 'internal scratch']
  #allocation2 [shape = 'f32[1,1024]{1,0:T(1,128)}', space=vmem, size = 0x1000, scoped, tag = 'scratch operand']
  %s0 = inlined_call_operand.vmem [shape: bf16[2,16,4], index: 0, kind: input, shape index: {}]
  %s1 = inlined_call_operand.vmem [shape: bf16[4,128], index: 1, kind: input, shape index: {}]
  %s2 = inlined_call_operand.vmem [shape: f32[1,128], index: 2, kind: input, shape index: {}]
  %s3 = inlined_call_operand.hbm [shape: bf16[128,128], index: 3, kind: input, shape index: {}]
  %s4 = inlined_call_operand.vmem [shape: f32[1,128], index: 4, kind: input, shape index: {}]
  %s5 = inlined_call_operand.hbm [shape: bf16[128,1024], index: 5, kind: input, shape index: {}]
  %s6 = inlined_call_operand.vmem [shape: f32[1,1024], index: 6, kind: input, shape index: {}]
  %s7 = inlined_call_operand.hbm [shape: f32[2,1,1024], index: 7, kind: output, shape index: {}]
  %s8 = sld [smem:[#allocation0]]
  $region77: #{tpu_custom_call.1} parent=0
    _
  %s10 = ssub.s32 1, %s8
  %s11 = scalar_select 0, %s10, %s8
  $region1: #{tpu_custom_call.1} parent=0
    #allocation3 [shape = 'u8[32768]{0}', space=vmem, size = 0x8000, scoped, tag = 'input window, operand 3, single buffered']
    #allocation4 [shape = 's32[2]{0}', space=sflag, size = 0x8, scoped, tag = 'scoped memory for tpu_custom_call.1']
    #allocation5 [shape = 's32[2]{0}', space=sflag, size = 0x8, scoped, tag = 'scoped memory for tpu_custom_call.1']
    #allocation6 [shape = 'u8[262144]{0}', space=vmem, size = 0x40000, scoped, tag = 'input window, operand 5, single buffered']
    #allocation7 [shape = 's32[1]{0}', space=sflag, size = 0x4, scoped, tag = 'scoped memory for tpu_custom_call.1']
    #allocation8 [shape = 'u8[8192]{0}', space=vmem, size = 0x2000, scoped, tag = 'output window, operand 0']
    %12 = vsyncpa [#allocation4], 0
    %13 = vsyncpa [#allocation7], 0
    %14 = vsyncpa [#allocation5], 0
    %s15 = scalar_lea.sflag [#allocation5], 1
    %16 = vsyncpa %s15, 0
    loop: start=0, step=1, limit=4
    $region2: #{tpu_custom_call.1} parent=1 // loop_pre_header
      _
    $region3: #{tpu_custom_call.1} parent=1 // loop_header
      %s18 = sphi 0, %s22
      %p19 = scmp.ge.s32.totalorder %s18, 4
      %s25 = sphi 0, %s44
      %s26 = sphi 0, %s40
      %s27 = sphi 0, %s36
      %s28 = sphi 0, %s25
      %s29 = sphi 0, %s26
      %s30 = sphi 0, %s27
      %s31 = sphi 0, %s28
      %s32 = sphi 0, %s29
      %s33 = sphi 0, %s30
      %s51 = sphi 0, %s53
      %s54 = sphi 0, %s51
      %s55 = sphi 0, %s54
      %s71 = sphi 0, %s55
      %s75 = sphi 0, %s75
      %s77 = sphi 0, %s75
      %s78 = sphi 0, %s77
      %s92 = sphi 0, %s78
      %s96 = sphi 0, %s96
      %s98 = sphi 0, %s96
      %s99 = sphi 0, %s98
      %s113 = sphi 0, %s99
      %s117 = sphi 0, %s117
      %s119 = sphi 0, %s117
      %s120 = sphi 0, %s119
      %s134 = sphi 0, %s120
      %s138 = sphi 0, %s138
      %s140 = sphi 0, %s138
      %s141 = sphi 0, %s140
      %s155 = sphi 0, %s141
      %s159 = sphi 0, %s159
      %s161 = sphi 0, %s159
      %s162 = sphi 0, %s161
      %s176 = sphi 0, %s162
      %s180 = sphi 0, %s180
      %s182 = sphi 0, %s180
      %s183 = sphi 0, %s182
      %s197 = sphi 0, %s183
      %s205 = sphi 0, %s207
      %s208 = sphi 0, %s205
      %s209 = sphi 0, %s208
      %s225 = sphi 0, %s209
    $region4: #{tpu_custom_call.1} parent=1 // loop_header_branch
      %21 = sbr.rel (%p19) target = $region8
    $region5: #{tpu_custom_call.1} parent=1 // loop_body
      %s23 = ssub.s32 %s18, 1
      %s24 = ssub.s32 %s18, 2
      %s34 = sadd.s32 1, %s27
      %p35 = scmp.ge.s32.totalorder %s34, 1
      %s36 = scalar_select %p35, 0, %s34
      %s37 = sadd.s32 1, %s26
      %s38 = scalar_select %p35, %s37, %s26
      %p39 = scmp.ge.s32.totalorder %s38, 1
      %s40 = scalar_select %p39, 0, %s38
      %s41 = sadd.s32 1, %s25
      %s42 = scalar_select %p39, %s41, %s25
      %p43 = scmp.ge.s32.totalorder %s42, 2
      %s44 = scalar_select %p43, 0, %s42
      %s45 = sadd.s32 %s26, %s27
      %s46 = sadd.s32 %s40, %s36
      %s47 = ssub.s32 %s25, %s44
      %s48 = ssub.s32 %s45, %s46
      %s49 = sor.u32 %s47, %s48
      %p50 = scmp.eq.s32.totalorder %s49, 0
      %s52 = sadd.s32 %s51, 1
      %s53 = scalar_select %p50, %s51, %s52
      %p56 = pneg %p50
      %p57 = scmp.eq.s32.totalorder %s18, 1
      %p58 = por %p56, %p57
      %p59 = scmp.ne.s32.totalorder %s51, %s54
      %p60 = scmp.eq.s32.totalorder %s18, 0
      %p61 = por %p59, %p60
      %p62 = scmp.ne.s32.totalorder %s51, %s54
      %p63 = scmp.eq.s32.totalorder %s23, 1
      %p64 = por %p62, %p63
      %p65 = scmp.ne.s32.totalorder %s54, %s55
      %p66 = scmp.eq.s32.totalorder %s23, 0
      %p67 = por %p65, %p66
      %p68 = scmp.ne.s32.totalorder %s54, %s55
      %p69 = scmp.eq.s32.totalorder %s24, 1
      %p70 = por %p68, %p69
      %p72 = scmp.ne.s32.totalorder %s55, %s71
      %p73 = scmp.eq.s32.totalorder %s24, 0
      %p74 = por %p72, %p73
      %s76 = sadd.s32 %s75, 1
      %p79 = scmp.eq.s32.totalorder %s18, 1
      %p80 = scmp.ne.s32.totalorder %s75, %s77
      %p81 = scmp.eq.s32.totalorder %s18, 0
      %p82 = por %p80, %p81
      %p83 = scmp.ne.s32.totalorder %s75, %s77
      %p84 = scmp.eq.s32.totalorder %s23, 1
      %p85 = por %p83, %p84
      %p86 = scmp.ne.s32.totalorder %s77, %s78
      %p87 = scmp.eq.s32.totalorder %s23, 0
      %p88 = por %p86, %p87
      %p89 = scmp.ne.s32.totalorder %s77, %s78
      %p90 = scmp.eq.s32.totalorder %s24, 1
      %p91 = por %p89, %p90
      %p93 = scmp.ne.s32.totalorder %s78, %s92
      %p94 = scmp.eq.s32.totalorder %s24, 0
      %p95 = por %p93, %p94
      %s97 = sadd.s32 %s96, 1
      %p100 = scmp.eq.s32.totalorder %s18, 1
      %p101 = scmp.ne.s32.totalorder %s96, %s98
      %p102 = scmp.eq.s32.totalorder %s18, 0
      %p103 = por %p101, %p102
      %p104 = scmp.ne.s32.totalorder %s96, %s98
      %p105 = scmp.eq.s32.totalorder %s23, 1
      %p106 = por %p104, %p105
      %p107 = scmp.ne.s32.totalorder %s98, %s99
      %p108 = scmp.eq.s32.totalorder %s23, 0
      %p109 = por %p107, %p108
      %p110 = scmp.ne.s32.totalorder %s98, %s99
      %p111 = scmp.eq.s32.totalorder %s24, 1
      %p112 = por %p110, %p111
      %p114 = scmp.ne.s32.totalorder %s99, %s113
      %p115 = scmp.eq.s32.totalorder %s24, 0
      %p116 = por %p114, %p115
      %s118 = sadd.s32 %s117, 1
      %p121 = scmp.eq.s32.totalorder %s18, 1
      %p122 = scmp.ne.s32.totalorder %s117, %s119
      %p123 = scmp.eq.s32.totalorder %s18, 0
      %p124 = por %p122, %p123
      %p125 = scmp.ne.s32.totalorder %s117, %s119
      %p126 = scmp.eq.s32.totalorder %s23, 1
      %p127 = por %p125, %p126
      %p128 = scmp.ne.s32.totalorder %s119, %s120
      %p129 = scmp.eq.s32.totalorder %s23, 0
      %p130 = por %p128, %p129
      %p131 = scmp.ne.s32.totalorder %s119, %s120
      %p132 = scmp.eq.s32.totalorder %s24, 1
      %p133 = por %p131, %p132
      %p135 = scmp.ne.s32.totalorder %s120, %s134
      %p136 = scmp.eq.s32.totalorder %s24, 0
      %p137 = por %p135, %p136
      %s139 = sadd.s32 %s138, 1
      %p142 = scmp.eq.s32.totalorder %s18, 1
      %p143 = scmp.ne.s32.totalorder %s138, %s140
      %p144 = scmp.eq.s32.totalorder %s18, 0
      %p145 = por %p143, %p144
      %p146 = scmp.ne.s32.totalorder %s138, %s140
      %p147 = scmp.eq.s32.totalorder %s23, 1
      %p148 = por %p146, %p147
      %p149 = scmp.ne.s32.totalorder %s140, %s141
      %p150 = scmp.eq.s32.totalorder %s23, 0
      %p151 = por %p149, %p150
      %p152 = scmp.ne.s32.totalorder %s140, %s141
      %p153 = scmp.eq.s32.totalorder %s24, 1
      %p154 = por %p152, %p153
      %p156 = scmp.ne.s32.totalorder %s141, %s155
      %p157 = scmp.eq.s32.totalorder %s24, 0
      %p158 = por %p156, %p157
      %s160 = sadd.s32 %s159, 1
      %p163 = scmp.eq.s32.totalorder %s18, 1
      %p164 = scmp.ne.s32.totalorder %s159, %s161
      %p165 = scmp.eq.s32.totalorder %s18, 0
      %p166 = por %p164, %p165
      %p167 = scmp.ne.s32.totalorder %s159, %s161
      %p168 = scmp.eq.s32.totalorder %s23, 1
      %p169 = por %p167, %p168
      %p170 = scmp.ne.s32.totalorder %s161, %s162
      %p171 = scmp.eq.s32.totalorder %s23, 0
      %p172 = por %p170, %p171
      %p173 = scmp.ne.s32.totalorder %s161, %s162
      %p174 = scmp.eq.s32.totalorder %s24, 1
      %p175 = por %p173, %p174
      %p177 = scmp.ne.s32.totalorder %s162, %s176
      %p178 = scmp.eq.s32.totalorder %s24, 0
      %p179 = por %p177, %p178
      %s181 = sadd.s32 %s180, 1
      %p184 = scmp.eq.s32.totalorder %s18, 1
      %p185 = scmp.ne.s32.totalorder %s180, %s182
      %p186 = scmp.eq.s32.totalorder %s18, 0
      %p187 = por %p185, %p186
      %p188 = scmp.ne.s32.totalorder %s180, %s182
      %p189 = scmp.eq.s32.totalorder %s23, 1
      %p190 = por %p188, %p189
      %p191 = scmp.ne.s32.totalorder %s182, %s183
      %p192 = scmp.eq.s32.totalorder %s23, 0
      %p193 = por %p191, %p192
      %p194 = scmp.ne.s32.totalorder %s182, %s183
      %p195 = scmp.eq.s32.totalorder %s24, 1
      %p196 = por %p194, %p195
      %p198 = scmp.ne.s32.totalorder %s183, %s197
      %p199 = scmp.eq.s32.totalorder %s24, 0
      %p200 = por %p198, %p199
      %s201 = ssub.s32 %s25, %s44
      %s202 = ssub.s32 %s26, %s40
      %s203 = sor.u32 %s201, %s202
      %p204 = scmp.eq.s32.totalorder %s203, 0
      %s206 = sadd.s32 %s205, 1
      %s207 = scalar_select %p204, %s205, %s206
      %p210 = pneg %p204
      %p211 = scmp.eq.s32.totalorder %s18, 1
      %p212 = por %p210, %p211
      %p213 = scmp.ne.s32.totalorder %s205, %s208
      %p214 = scmp.eq.s32.totalorder %s18, 0
      %p215 = por %p213, %p214
      %p216 = scmp.ne.s32.totalorder %s205, %s208
      %p217 = scmp.eq.s32.totalorder %s23, 1
      %p218 = por %p216, %p217
      %p219 = scmp.ne.s32.totalorder %s208, %s209
      %p220 = scmp.eq.s32.totalorder %s23, 0
      %p221 = por %p219, %p220
      %p222 = scmp.ne.s32.totalorder %s208, %s209
      %p223 = scmp.eq.s32.totalorder %s24, 1
      %p224 = por %p222, %p223
      %p226 = scmp.ne.s32.totalorder %s209, %s225
      %p227 = scmp.eq.s32.totalorder %s24, 0
      %p228 = por %p226, %p227
      %p229 = scmp.le.s32.totalorder 1, %s18
      %p230 = scmp.lt.s32.totalorder %s18, 3
      %p231 = pnand %p229, %p230
      %p232 = pneg %p231
      // Predicated region
      $region9: #{tpu_custom_call.1} parent=5 // pred_check
        _
      $region10: #{tpu_custom_call.1} parent=5 // pred_check_branch
        %234 = sbr.rel (%p231) target = $region12
      $region11: #{tpu_custom_call.1} parent=5 // pred_region
        %s235 = ssub.s32 %s18, 1
        // Predicated region
        $region13: #{tpu_custom_call.1} parent=11 // pred_check
          %p236 = pneg %p88
        $region14: #{tpu_custom_call.1} parent=11 // pred_check_branch
          %238 = sbr.rel (%p236) target = $region16
        $region15: #{tpu_custom_call.1} parent=11 // pred_region
          _
        $region16: #{tpu_custom_call.1} parent=11 // pred_fallthru
          _
        // Predicated region
        $region17: #{tpu_custom_call.1} parent=11 // pred_check
          %p239 = pneg %p109
        $region18: #{tpu_custom_call.1} parent=11 // pred_check_branch
          %241 = sbr.rel (%p239) target = $region20
        $region19: #{tpu_custom_call.1} parent=11 // pred_region
          _
        $region20: #{tpu_custom_call.1} parent=11 // pred_fallthru
          _
        // Predicated region
        $region21: #{tpu_custom_call.1} parent=11 // pred_check
          %p242 = pneg %p130
        $region22: #{tpu_custom_call.1} parent=11 // pred_check_branch
          %244 = sbr.rel (%p242) target = $region24
        $region23: #{tpu_custom_call.1} parent=11 // pred_region
          %s246 = ssub.s32 1024, 1024
          %247 = vsyncadd [#allocation4], %s246
          %s248 = sshll.u32 [#allocation3], 4
          %s249 = int_to_ptr.vmem [resolvable:$true] %s248
          %254 = dma.hbm_to_vmem [thread:$0]  %s3, 1024, %s249, [#allocation4], 64, 64, 4
        $region24: #{tpu_custom_call.1} parent=11 // pred_fallthru
          _
        // Predicated region
        $region25: #{tpu_custom_call.1} parent=11 // pred_check
          %p255 = pneg %p151
        $region26: #{tpu_custom_call.1} parent=11 // pred_check_branch
          %257 = sbr.rel (%p255) target = $region28
        $region27: #{tpu_custom_call.1} parent=11 // pred_region
          _
        $region28: #{tpu_custom_call.1} parent=11 // pred_fallthru
          _
        // Predicated region
        $region29: #{tpu_custom_call.1} parent=11 // pred_check
          %p258 = pneg %p172
        $region30: #{tpu_custom_call.1} parent=11 // pred_check_branch
          %260 = sbr.rel (%p258) target = $region32
        $region31: #{tpu_custom_call.1} parent=11 // pred_region
          %s262 = ssub.s32 8192, 8192
          %263 = vsyncadd [#allocation7], %s262
          %s264 = sshll.u32 [#allocation6], 4
          %s265 = int_to_ptr.vmem [resolvable:$true] %s264
          %270 = dma.hbm_to_vmem [thread:$0]  %s5, 8192, %s265, [#allocation7], 512, 512, 32
        $region32: #{tpu_custom_call.1} parent=11 // pred_fallthru
          _
        // Predicated region
        $region33: #{tpu_custom_call.1} parent=11 // pred_check
          %p271 = pneg %p193
        $region34: #{tpu_custom_call.1} parent=11 // pred_check_branch
          %273 = sbr.rel (%p271) target = $region36
        $region35: #{tpu_custom_call.1} parent=11 // pred_region
          _
        $region36: #{tpu_custom_call.1} parent=11 // pred_fallthru
          _
      $region12: #{tpu_custom_call.1} parent=5 // pred_fallthru
        _
      %p274 = scmp.lt.s32.totalorder %s18, 2
      // Predicated region
      $region37: #{tpu_custom_call.1} parent=5 // pred_check
        %p275 = pneg %p274
      $region38: #{tpu_custom_call.1} parent=5 // pred_check_branch
        %277 = sbr.rel (%p275) target = $region40
      $region39: #{tpu_custom_call.1} parent=5 // pred_region
        // Predicated region
        $region41: #{tpu_custom_call.1} parent=39 // pred_check
          %p278 = pneg %p61
        $region42: #{tpu_custom_call.1} parent=39 // pred_check_branch
          %280 = sbr.rel (%p278) target = $region44
        $region43: #{tpu_custom_call.1} parent=39 // pred_region
          %s281 = sadd.s32 %s26, %s27
          %s282 = smul.u32 2, %s281
          %p283 = scmp.lt.s32.totalorder %s25, 1
          %s284 = scalar_select %p283, %s25, 1
          %p285 = scmp.lt.s32.totalorder %s282, 1
          %s286 = scalar_select %p285, %s282, 1
          %s287 = smul.addr %s284, 2
          %s288 = sadd.s32 %s286, %s287
          %s289 = smul.addr %s288, 4
          %s290 = scalar_lea.vmem %s0, %s289
          %s291 = sadd.s32 %s26, %s27
          %s292 = smul.u32 2, %s291
        $region44: #{tpu_custom_call.1} parent=39 // pred_fallthru
          _
      $region40: #{tpu_custom_call.1} parent=5 // pred_fallthru
        _
      %p293 = scmp.le.s32.totalorder 1, %s18
      %p294 = scmp.lt.s32.totalorder %s18, 3
      %p295 = pnand %p293, %p294
      %p296 = pneg %p295
      // Predicated region
      $region45: #{tpu_custom_call.1} parent=5 // pred_check
        _
      $region46: #{tpu_custom_call.1} parent=5 // pred_check_branch
        %298 = sbr.rel (%p295) target = $region48
      $region47: #{tpu_custom_call.1} parent=5 // pred_region
        %s299 = ssub.s32 %s18, 1
        // Predicated region
        $region49: #{tpu_custom_call.1} parent=47 // pred_check
          %p300 = pneg %p130
        $region50: #{tpu_custom_call.1} parent=47 // pred_check_branch
          %302 = sbr.rel (%p300) target = $region52
        $region51: #{tpu_custom_call.1} parent=47 // pred_region
          %303 = dma.done [#allocation4], 1024
        $region52: #{tpu_custom_call.1} parent=47 // pred_fallthru
          _
        // Predicated region
        $region53: #{tpu_custom_call.1} parent=47 // pred_check
          %p304 = pneg %p172
        $region54: #{tpu_custom_call.1} parent=47 // pred_check_branch
          %306 = sbr.rel (%p304) target = $region56
        $region55: #{tpu_custom_call.1} parent=47 // pred_region
          %307 = dma.done [#allocation7], 8192
        $region56: #{tpu_custom_call.1} parent=47 // pred_fallthru
          _
        %s308 = sadd.s32 %s29, %s30
        %s309 = smul.u32 2, %s308
        %p310 = scmp.lt.s32.totalorder %s28, 1
        %s311 = scalar_select %p310, %s28, 1
        %p312 = scmp.lt.s32.totalorder %s309, 1
        %s313 = scalar_select %p312, %s309, 1
        %s314 = smul.addr %s311, 2
        %s315 = sadd.s32 %s313, %s314
        %s316 = smul.addr %s315, 4
        %s317 = scalar_lea.vmem %s0, %s316
        %p318 = pneg %p67
        %p319 = pneg %p64
        %p320 = pneg %p88
        %p321 = pneg %p85
        %p322 = pneg %p109
        %p323 = pneg %p106
        %p324 = pneg %p130
        %p325 = pneg %p127
        %p326 = pneg %p151
        %p327 = pneg %p148
        %p328 = pneg %p172
        %p329 = pneg %p169
        %p330 = pneg %p193
        %p331 = pneg %p190
        %p332 = pneg %p221
        %p333 = pneg %p218
        %s334 = sand.u32 %s208, 1
        %s335 = scalar_lea.sflag [#allocation5], %s334
        %s336 = sand.u32 %s208, 1
        %s337 = smul.addr %s336, 8
        %s338 = scalar_lea.vmem [#allocation8], %s337
        %s339 = sadd.s32 %s29, %s30
        %s340 = smul.u32 2, %s339
        %p341 = scmp.lt.s32.totalorder %s28, 1
        %s342 = scalar_select %p341, %s28, 1
        %p343 = scmp.lt.s32.totalorder %s340, 1
        %s344 = scalar_select %p343, %s340, 1
        %s345 = smul.addr %s342, 2
        %s346 = sadd.s32 %s344, %s345
        %s347 = smul.addr %s346, 4
        %s348 = scalar_lea.vmem %s0, %s347
        %s349 = sadd.s32 %s29, %s30
        %s350 = smul.u32 2, %s349
        %p352 = scmp.eq.s32.totalorder %s30, 0
        // Predicated region
        $region57: #{tpu_custom_call.1} parent=47 // pred_check
          %p353 = pneg %p352
        $region58: #{tpu_custom_call.1} parent=47 // pred_check_branch
          %355 = sbr.rel (%p353) target = $region60
        $region59: #{tpu_custom_call.1} parent=47 // pred_region
          %356 = vst [vmem:[#allocation2] sm:$0xff] -inf
        $region60: #{tpu_custom_call.1} parent=47 // pred_fallthru
          _
        %v357 = vld [vmem:[%s348] sm:$0xf]
        %v358 = vld [vmem:[%s348 + $0x4] sm:$0xf]
        %v359 = vld [vmem:[%s1] sm:$0x3]
        %v360 = vld [vmem:[%s2] sm:$0x1]
        %v362 = vlaneseq
        %v363 = vshrl.u32 %v362, 7
        %v364 = vsub.s32 0, %v363
        %v365 = vrot.slane %v360, %v364
        %v369 = vunpack.c.l.b16 %v357
        %v370 = vunpack.c.l.b16 %v358
        %v371 = vpack.c.b16 %v370, %v369
        %vm372 = vcmask 31744
        %v374 = vsel %vm372, %v371, 0
        %vm376 = vcmask 1041408
        %v378 = vsel %vm376, %v359, 0
        %380 = vmatprep.subr.bf16.mxu0 0
        %381 = vmatpush1.bf16.msra.mxu0 %v378
        %382 = vmatprep.subr.bf16.mxu0 0
        %383 = vmatpush1.bf16.msra.mxu0 0
        %384 = vmatprep.subr.bf16.mxu0 0
        %385 = vmatpush1.bf16.msra.mxu0 0
        %386 = vmatprep.subr.bf16.mxu0 0
        %387 = vmatpush1.bf16.msra.mxu0 0
        %388 = vmatprep.subr.bf16.mxu0 0
        %389 = vmatpush1.bf16.msra.mxu0 0
        %390 = vmatprep.subr.bf16.mxu0 0
        %391 = vmatpush1.bf16.msra.mxu0 0
        %392 = vmatprep.subr.bf16.mxu0 0
        %393 = vmatpush1.bf16.msra.mxu0 0
        %394 = vmatprep.subr.bf16.mxu0 0
        %395 = vmatpush1.bf16.msra.mxu0 0
        %396 = vmatprep.subr.bf16.mxu0 0
        %397 = vmatpush1.bf16.msra.mxu0 0
        %398 = vmatprep.subr.bf16.mxu0 0
        %399 = vmatpush1.bf16.msra.mxu0 0
        %400 = vmatprep.subr.bf16.mxu0 0
        %401 = vmatpush1.bf16.msra.mxu0 0
        %402 = vmatprep.subr.bf16.mxu0 0
        %403 = vmatpush1.bf16.msra.mxu0 0
        %404 = vmatprep.subr.bf16.mxu0 0
        %405 = vmatpush1.bf16.msra.mxu0 0
        %406 = vmatprep.subr.bf16.mxu0 0
        %407 = vmatpush1.bf16.msra.mxu0 0
        %408 = vmatprep.subr.bf16.mxu0 0
        %409 = vmatpush1.bf16.msra.mxu0 0
        %410 = vmatprep.subr.bf16.mxu0 0
        %411 = vmatpush1.bf16.msra.mxu0 0
        %412 = vmatprep.mubr.bf16.mxu0 0
        %413 = vmatmul.mubr.bf16.gmra.mrb[0].mxu0 %v374
        %v414 = vpop.f32.mrb[0].mxu0
        %v415 = vadd.f32 %v365, %v414
        %v416 = vpop.f32.mrb[0].mxu0
        %v417 = vpop.f32.mrb[0].mxu0
        %v418 = vadd.f32 %v365, %v417
        %v419 = vpop.f32.mrb[0].mxu0
        %420 = vdwg.mxu0
        %v421 = vmax.f32 %v415, 0.0
        %v422 = vmax.f32 %v418, 0.0
        %v423 = vpack.c.bf16 %v422, %v421
        %v424 = vld [vmem:[#allocation3] sm:$0xf]
        %v425 = vld [vmem:[#allocation3 + $0x4] sm:$0xf]
        %v426 = vld [vmem:[#allocation3 + $0x8] sm:$0xf]
        %v427 = vld [vmem:[#allocation3 + $0xc] sm:$0xf]
        %v428 = vld [vmem:[#allocation3 + $0x10] sm:$0xf]
        %v429 = vld [vmem:[#allocation3 + $0x14] sm:$0xf]
        %v430 = vld [vmem:[#allocation3 + $0x18] sm:$0xf]
        %v431 = vld [vmem:[#allocation3 + $0x1c] sm:$0xf]
        %v432 = vld [vmem:[#allocation3 + $0x20] sm:$0xf]
        %v433 = vld [vmem:[#allocation3 + $0x24] sm:$0xf]
        %v434 = vld [vmem:[#allocation3 + $0x28] sm:$0xf]
        %v435 = vld [vmem:[#allocation3 + $0x2c] sm:$0xf]
        %v436 = vld [vmem:[#allocation3 + $0x30] sm:$0xf]
        %v437 = vld [vmem:[#allocation3 + $0x34] sm:$0xf]
        %v438 = vld [vmem:[#allocation3 + $0x38] sm:$0xf]
        %v439 = vld [vmem:[#allocation3 + $0x3c] sm:$0xf]
        %v440 = vld [vmem:[%s4] sm:$0x1]
        %v442 = vlaneseq
        %v443 = vshrl.u32 %v442, 7
        %v444 = vsub.s32 0, %v443
        %v445 = vrot.slane %v440, %v444
        %v463 = vunpack.c.l.b16 %v424
        %v464 = vunpack.c.l.b16 %v425
        %v465 = vunpack.c.l.b16 %v426
        %v466 = vunpack.c.l.b16 %v427
        %v467 = vunpack.c.l.b16 %v428
        %v468 = vunpack.c.l.b16 %v429
        %v469 = vunpack.c.l.b16 %v430
        %v470 = vunpack.c.l.b16 %v431
        %v471 = vunpack.c.l.b16 %v432
        %v472 = vunpack.c.l.b16 %v433
        %v473 = vunpack.c.l.b16 %v434
        %v474 = vunpack.c.l.b16 %v435
        %v475 = vunpack.c.l.b16 %v436
        %v476 = vunpack.c.l.b16 %v437
        %v477 = vunpack.c.l.b16 %v438
        %v478 = vunpack.c.l.b16 %v439
        %v479 = vpack.c.b16 %v464, %v463
        %v480 = vpack.c.b16 %v466, %v465
        %v481 = vpack.c.b16 %v468, %v467
        %v482 = vpack.c.b16 %v470, %v469
        %v483 = vpack.c.b16 %v472, %v471
        %v484 = vpack.c.b16 %v474, %v473
        %v485 = vpack.c.b16 %v476, %v475
        %v486 = vpack.c.b16 %v478, %v477
        %495 = vmatprep.subr.bf16.mxu0 0
        %496 = vmatpush1.bf16.msra.mxu0 %v479
        %497 = vmatprep.subr.bf16.mxu0 0
        %498 = vmatpush1.bf16.msra.mxu0 %v480
        %499 = vmatprep.subr.bf16.mxu0 0
        %500 = vmatpush1.bf16.msra.mxu0 %v481
        %501 = vmatprep.subr.bf16.mxu0 0
        %502 = vmatpush1.bf16.msra.mxu0 %v482
        %503 = vmatprep.subr.bf16.mxu0 0
        %504 = vmatpush1.bf16.msra.mxu0 %v483
        %505 = vmatprep.subr.bf16.mxu0 0
        %506 = vmatpush1.bf16.msra.mxu0 %v484
        %507 = vmatprep.subr.bf16.mxu0 0
        %508 = vmatpush1.bf16.msra.mxu0 %v485
        %509 = vmatprep.subr.bf16.mxu0 0
        %510 = vmatpush1.bf16.msra.mxu0 %v486
        %511 = vmatprep.subr.bf16.mxu0 0
        %512 = vmatpush1.bf16.msra.mxu0 0
        %513 = vmatprep.subr.bf16.mxu0 0
        %514 = vmatpush1.bf16.msra.mxu0 0
        %515 = vmatprep.subr.bf16.mxu0 0
        %516 = vmatpush1.bf16.msra.mxu0 0
        %517 = vmatprep.subr.bf16.mxu0 0
        %518 = vmatpush1.bf16.msra.mxu0 0
        %519 = vmatprep.subr.bf16.mxu0 0
        %520 = vmatpush1.bf16.msra.mxu0 0
        %521 = vmatprep.subr.bf16.mxu0 0
        %522 = vmatpush1.bf16.msra.mxu0 0
        %523 = vmatprep.subr.bf16.mxu0 0
        %524 = vmatpush1.bf16.msra.mxu0 0
        %525 = vmatprep.subr.bf16.mxu0 0
        %526 = vmatpush1.bf16.msra.mxu0 0
        %527 = vmatprep.mubr.bf16.mxu0 0
        %528 = vmatmul.mubr.bf16.gmra.mrb[0].mxu0 %v423
        %v529 = vpop.f32.mrb[0].mxu0
        %v530 = vadd.f32 %v445, %v529
        %v531 = vpop.f32.mrb[0].mxu0
        %v532 = vpop.f32.mrb[0].mxu0
        %v533 = vadd.f32 %v445, %v532
        %v534 = vpop.f32.mrb[0].mxu0
        %535 = vdwg.mxu0
        %v536 = vmax.f32 %v530, 0.0
        %v537 = vmax.f32 %v533, 0.0
        %v538 = vpack.c.bf16 %v537, %v536
        %v539 = vld [vmem:[#allocation6] sm:$0xff]
        %v540 = vld [vmem:[#allocation6 + $0x20] sm:$0xff]
        %v541 = vld [vmem:[#allocation6 + $0x40] sm:$0xff]
        %v542 = vld [vmem:[#allocation6 + $0x60] sm:$0xff]
        %v543 = vld [vmem:[#allocation6 + $0x80] sm:$0xff]
        %v544 = vld [vmem:[#allocation6 + $0xa0] sm:$0xff]
        %v545 = vld [vmem:[#allocation6 + $0xc0] sm:$0xff]
        %v546 = vld [vmem:[#allocation6 + $0xe0] sm:$0xff]
        %v547 = vld [vmem:[#allocation6 + $0x100] sm:$0xff]
        %v548 = vld [vmem:[#allocation6 + $0x120] sm:$0xff]
        %v549 = vld [vmem:[#allocation6 + $0x140] sm:$0xff]
        %v550 = vld [vmem:[#allocation6 + $0x160] sm:$0xff]
        %v551 = vld [vmem:[#allocation6 + $0x180] sm:$0xff]
        %v552 = vld [vmem:[#allocation6 + $0x1a0] sm:$0xff]
        %v553 = vld [vmem:[#allocation6 + $0x1c0] sm:$0xff]
        %v554 = vld [vmem:[#allocation6 + $0x1e0] sm:$0xff]
        %v571 = vunpack.c.l.b16 %v539
        %v572 = vunpack.c.h.b16 %v539
        %v573 = vunpack.c.l.b16 %v540
        %v574 = vunpack.c.h.b16 %v540
        %v575 = vunpack.c.l.b16 %v541
        %v576 = vunpack.c.h.b16 %v541
        %v577 = vunpack.c.l.b16 %v542
        %v578 = vunpack.c.h.b16 %v542
        %v579 = vunpack.c.l.b16 %v543
        %v580 = vunpack.c.h.b16 %v543
        %v581 = vunpack.c.l.b16 %v544
        %v582 = vunpack.c.h.b16 %v544
        %v583 = vunpack.c.l.b16 %v545
        %v584 = vunpack.c.h.b16 %v545
        %v585 = vunpack.c.l.b16 %v546
        %v586 = vunpack.c.h.b16 %v546
        %v587 = vunpack.c.l.b16 %v547
        %v588 = vunpack.c.h.b16 %v547
        %v589 = vunpack.c.l.b16 %v548
        %v590 = vunpack.c.h.b16 %v548
        %v591 = vunpack.c.l.b16 %v549
        %v592 = vunpack.c.h.b16 %v549
        %v593 = vunpack.c.l.b16 %v550
        %v594 = vunpack.c.h.b16 %v550
        %v595 = vunpack.c.l.b16 %v551
        %v596 = vunpack.c.h.b16 %v551
        %v597 = vunpack.c.l.b16 %v552
        %v598 = vunpack.c.h.b16 %v552
        %v599 = vunpack.c.l.b16 %v553
        %v600 = vunpack.c.h.b16 %v553
        %v601 = vunpack.c.l.b16 %v554
        %v602 = vunpack.c.h.b16 %v554
        %v603 = vpack.c.b16 %v573, %v571
        %v604 = vpack.c.b16 %v574, %v572
        %v605 = vpack.c.b16 %v577, %v575
        %v606 = vpack.c.b16 %v578, %v576
        %v607 = vpack.c.b16 %v581, %v579
        %v608 = vpack.c.b16 %v582, %v580
        %v609 = vpack.c.b16 %v585, %v583
        %v610 = vpack.c.b16 %v586, %v584
        %v611 = vpack.c.b16 %v589, %v587
        %v612 = vpack.c.b16 %v590, %v588
        %v613 = vpack.c.b16 %v593, %v591
        %v614 = vpack.c.b16 %v594, %v592
        %v615 = vpack.c.b16 %v597, %v595
        %v616 = vpack.c.b16 %v598, %v596
        %v617 = vpack.c.b16 %v601, %v599
        %v618 = vpack.c.b16 %v602, %v600
        %635 = vmatprep.subr.bf16.mxu0 %v604
        %636 = vmatpush1.bf16.msra.mxu0 %v603
        %637 = vmatprep.subr.bf16.mxu0 %v606
        %638 = vmatpush1.bf16.msra.mxu0 %v605
        %639 = vmatprep.subr.bf16.mxu0 %v608
        %640 = vmatpush1.bf16.msra.mxu0 %v607
        %641 = vmatprep.subr.bf16.mxu0 %v610
        %642 = vmatpush1.bf16.msra.mxu0 %v609
        %643 = vmatprep.subr.bf16.mxu0 %v612
        %644 = vmatpush1.bf16.msra.mxu0 %v611
        %645 = vmatprep.subr.bf16.mxu0 %v614
        %646 = vmatpush1.bf16.msra.mxu0 %v613
        %647 = vmatprep.subr.bf16.mxu0 %v616
        %648 = vmatpush1.bf16.msra.mxu0 %v615
        %649 = vmatprep.subr.bf16.mxu0 %v618
        %650 = vmatpush1.bf16.msra.mxu0 %v617
        %651 = vmatprep.subr.bf16.mxu0 0
        %652 = vmatpush1.bf16.msra.mxu0 0
        %653 = vmatprep.subr.bf16.mxu0 0
        %654 = vmatpush1.bf16.msra.mxu0 0
        %655 = vmatprep.subr.bf16.mxu0 0
        %656 = vmatpush1.bf16.msra.mxu0 0
        %657 = vmatprep.subr.bf16.mxu0 0
        %658 = vmatpush1.bf16.msra.mxu0 0
        %659 = vmatprep.subr.bf16.mxu0 0
        %660 = vmatpush1.bf16.msra.mxu0 0
        %661 = vmatprep.subr.bf16.mxu0 0
        %662 = vmatpush1.bf16.msra.mxu0 0
        %663 = vmatprep.subr.bf16.mxu0 0
        %664 = vmatpush1.bf16.msra.mxu0 0
        %665 = vmatprep.subr.bf16.mxu0 0
        %666 = vmatpush1.bf16.msra.mxu0 0
        %667 = vmatprep.mubr.bf16.mxu0 0
        %668 = vmatmul.mubr.bf16.gmra.mrb[0].mxu0 %v538
        %v669 = vpop.f32.mrb[0].mxu0
        %v670 = vadd.f32 0.0, %v669
        %v671 = vpop.f32.mrb[0].mxu0
        %v672 = vadd.f32 0.0, %v671
        %v673 = vpop.f32.mrb[0].mxu0
        %v674 = vadd.f32 0.0, %v673
        %v675 = vpop.f32.mrb[0].mxu0
        %v676 = vadd.f32 0.0, %v675
        %677 = vdwg.mxu0
        %v678 = vld [vmem:[#allocation2] sm:$0x3]
        %v679 = vmax.f32 %v670, %v674
        %v680 = vrot.slane %v679, 4
        %v681 = vmax.f32 %v679, %v680
        %v682 = vrot.slane %v681, 2
        %v683 = vmax.f32 %v681, %v682
        %v684 = vrot.slane %v683, 1
        %v685 = vmax.f32 %v683, %v684
        %v686 = vmax.f32 %v672, %v676
        %v687 = vrot.slane %v686, 4
        %v688 = vmax.f32 %v686, %v687
        %v689 = vrot.slane %v688, 2
        %v690 = vmax.f32 %v688, %v689
        %v691 = vrot.slane %v690, 1
        %v692 = vmax.f32 %v690, %v691
        %v695 = vcombine.low %v685, %v692
        %v697 = vunpack.c.l.s4 1966171168
        %v698 = vunpack.c.0.s8 %v697
        %v699 = vlaneseq
        %v700 = vshrl.u32 %v699, 7
        %v701 = vsub.s32 %v698, %v700
        %v702 = vrot.slane %v695, %v701
        %v704 = vunpack.c.l.s4 1966171168
        %v705 = vunpack.c.0.s8 %v704
        %v706 = vlaneseq
        %v707 = vshrl.u32 %v706, 7
        %v708 = vsub.s32 %v705, %v707
        %v709 = vrot.slane %v702, %v708
        %v711 = vmax.f32 %v678, %v709
        %v712 = vlaneseq
        %vm713 = vcmp.ge.s32.totalorder %v712, 0
        %vm714 = vcmp.lt.s32.totalorder %v712, 256
        %vm715 = vmand %vm713, %vm714
        %716 = vst.msk [vmem:[#allocation2] sm:$0x3] %vm715, %v711
        %v717 = vld [vmem:[#allocation6 + $0x8] sm:$0xff]
        %v718 = vld [vmem:[#allocation6 + $0x28] sm:$0xff]
        %v719 = vld [vmem:[#allocation6 + $0x48] sm:$0xff]
        %v720 = vld [vmem:[#allocation6 + $0x68] sm:$0xff]
        %v721 = vld [vmem:[#allocation6 + $0x88] sm:$0xff]
        %v722 = vld [vmem:[#allocation6 + $0xa8] sm:$0xff]
        %v723 = vld [vmem:[#allocation6 + $0xc8] sm:$0xff]
        %v724 = vld [vmem:[#allocation6 + $0xe8] sm:$0xff]
        %v725 = vld [vmem:[#allocation6 + $0x108] sm:$0xff]
        %v726 = vld [vmem:[#allocation6 + $0x128] sm:$0xff]
        %v727 = vld [vmem:[#allocation6 + $0x148] sm:$0xff]
        %v728 = vld [vmem:[#allocation6 + $0x168] sm:$0xff]
        %v729 = vld [vmem:[#allocation6 + $0x188] sm:$0xff]
        %v730 = vld [vmem:[#allocation6 + $0x1a8] sm:$0xff]
        %v731 = vld [vmem:[#allocation6 + $0x1c8] sm:$0xff]
        %v732 = vld [vmem:[#allocation6 + $0x1e8] sm:$0xff]
        %v749 = vunpack.c.l.b16 %v717
        %v750 = vunpack.c.h.b16 %v717
        %v751 = vunpack.c.l.b16 %v718
        %v752 = vunpack.c.h.b16 %v718
        %v753 = vunpack.c.l.b16 %v719
        %v754 = vunpack.c.h.b16 %v719
        %v755 = vunpack.c.l.b16 %v720
        %v756 = vunpack.c.h.b16 %v720
        %v757 = vunpack.c.l.b16 %v721
        %v758 = vunpack.c.h.b16 %v721
        %v759 = vunpack.c.l.b16 %v722
        %v760 = vunpack.c.h.b16 %v722
        %v761 = vunpack.c.l.b16 %v723
        %v762 = vunpack.c.h.b16 %v723
        %v763 = vunpack.c.l.b16 %v724
        %v764 = vunpack.c.h.b16 %v724
        %v765 = vunpack.c.l.b16 %v725
        %v766 = vunpack.c.h.b16 %v725
        %v767 = vunpack.c.l.b16 %v726
        %v768 = vunpack.c.h.b16 %v726
        %v769 = vunpack.c.l.b16 %v727
        %v770 = vunpack.c.h.b16 %v727
        %v771 = vunpack.c.l.b16 %v728
        %v772 = vunpack.c.h.b16 %v728
        %v773 = vunpack.c.l.b16 %v729
        %v774 = vunpack.c.h.b16 %v729
        %v775 = vunpack.c.l.b16 %v730
        %v776 = vunpack.c.h.b16 %v730
        %v777 = vunpack.c.l.b16 %v731
        %v778 = vunpack.c.h.b16 %v731
        %v779 = vunpack.c.l.b16 %v732
        %v780 = vunpack.c.h.b16 %v732
        %v781 = vpack.c.b16 %v751, %v749
        %v782 = vpack.c.b16 %v752, %v750
        %v783 = vpack.c.b16 %v755, %v753
        %v784 = vpack.c.b16 %v756, %v754
        %v785 = vpack.c.b16 %v759, %v757
        %v786 = vpack.c.b16 %v760, %v758
        %v787 = vpack.c.b16 %v763, %v761
        %v788 = vpack.c.b16 %v764, %v762
        %v789 = vpack.c.b16 %v767, %v765
        %v790 = vpack.c.b16 %v768, %v766
        %v791 = vpack.c.b16 %v771, %v769
        %v792 = vpack.c.b16 %v772, %v770
        %v793 = vpack.c.b16 %v775, %v773
        %v794 = vpack.c.b16 %v776, %v774
        %v795 = vpack.c.b16 %v779, %v777
        %v796 = vpack.c.b16 %v780, %v778
        %813 = vmatprep.subr.bf16.mxu0 %v782
        %814 = vmatpush1.bf16.msra.mxu0 %v781
        %815 = vmatprep.subr.bf16.mxu0 %v784
        %816 = vmatpush1.bf16.msra.mxu0 %v783
        %817 = vmatprep.subr.bf16.mxu0 %v786
        %818 = vmatpush1.bf16.msra.mxu0 %v785
        %819 = vmatprep.subr.bf16.mxu0 %v788
        %820 = vmatpush1.bf16.msra.mxu0 %v787
        %821 = vmatprep.subr.bf16.mxu0 %v790
        %822 = vmatpush1.bf16.msra.mxu0 %v789
        %823 = vmatprep.subr.bf16.mxu0 %v792
        %824 = vmatpush1.bf16.msra.mxu0 %v791
        %825 = vmatprep.subr.bf16.mxu0 %v794
        %826 = vmatpush1.bf16.msra.mxu0 %v793
        %827 = vmatprep.subr.bf16.mxu0 %v796
        %828 = vmatpush1.bf16.msra.mxu0 %v795
        %829 = vmatprep.subr.bf16.mxu0 0
        %830 = vmatpush1.bf16.msra.mxu0 0
        %831 = vmatprep.subr.bf16.mxu0 0
        %832 = vmatpush1.bf16.msra.mxu0 0
        %833 = vmatprep.subr.bf16.mxu0 0
        %834 = vmatpush1.bf16.msra.mxu0 0
        %835 = vmatprep.subr.bf16.mxu0 0
        %836 = vmatpush1.bf16.msra.mxu0 0
        %837 = vmatprep.subr.bf16.mxu0 0
        %838 = vmatpush1.bf16.msra.mxu0 0
        %839 = vmatprep.subr.bf16.mxu0 0
        %840 = vmatpush1.bf16.msra.mxu0 0
        %841 = vmatprep.subr.bf16.mxu0 0
        %842 = vmatpush1.bf16.msra.mxu0 0
        %843 = vmatprep.subr.bf16.mxu0 0
        %844 = vmatpush1.bf16.msra.mxu0 0
        %845 = vmatprep.mubr.bf16.mxu0 0
        %846 = vmatmul.mubr.bf16.gmra.mrb[0].mxu0 %v538
        %v847 = vpop.f32.mrb[0].mxu0
        %v848 = vadd.f32 0.0, %v847
        %v849 = vpop.f32.mrb[0].mxu0
        %v850 = vadd.f32 0.0, %v849
        %v851 = vpop.f32.mrb[0].mxu0
        %v852 = vadd.f32 0.0, %v851
        %v853 = vpop.f32.mrb[0].mxu0
        %v854 = vadd.f32 0.0, %v853
        %855 = vdwg.mxu0
        %v856 = vld [vmem:[#allocation2 + $0x2] sm:$0x3]
        %v857 = vmax.f32 %v848, %v852
        %v858 = vrot.slane %v857, 4
        %v859 = vmax.f32 %v857, %v858
        %v860 = vrot.slane %v859, 2
        %v861 = vmax.f32 %v859, %v860
        %v862 = vrot.slane %v861, 1
        %v863 = vmax.f32 %v861, %v862
        %v864 = vmax.f32 %v850, %v854
        %v865 = vrot.slane %v864, 4
        %v866 = vmax.f32 %v864, %v865
        %v867 = vrot.slane %v866, 2
        %v868 = vmax.f32 %v866, %v867
        %v869 = vrot.slane %v868, 1
        %v870 = vmax.f32 %v868, %v869
        %v873 = vcombine.low %v863, %v870
        %v875 = vunpack.c.l.s4 1966171168
        %v876 = vunpack.c.0.s8 %v875
        %v877 = vlaneseq
        %v878 = vshrl.u32 %v877, 7
        %v879 = vsub.s32 %v876, %v878
        %v880 = vrot.slane %v873, %v879
        %v882 = vunpack.c.l.s4 1966171168
        %v883 = vunpack.c.0.s8 %v882
        %v884 = vlaneseq
        %v885 = vshrl.u32 %v884, 7
        %v886 = vsub.s32 %v883, %v885
        %v887 = vrot.slane %v880, %v886
        %v889 = vmax.f32 %v856, %v887
        %890 = vst.msk [vmem:[#allocation2 + $0x2] sm:$0x3] %vm715, %v889
        %v891 = vld [vmem:[#allocation6 + $0x10] sm:$0xff]
        %v892 = vld [vmem:[#allocation6 + $0x30] sm:$0xff]
        %v893 = vld [vmem:[#allocation6 + $0x50] sm:$0xff]
        %v894 = vld [vmem:[#allocation6 + $0x70] sm:$0xff]
        %v895 = vld [vmem:[#allocation6 + $0x90] sm:$0xff]
        %v896 = vld [vmem:[#allocation6 + $0xb0] sm:$0xff]
        %v897 = vld [vmem:[#allocation6 + $0xd0] sm:$0xff]
        %v898 = vld [vmem:[#allocation6 + $0xf0] sm:$0xff]
        %v899 = vld [vmem:[#allocation6 + $0x110] sm:$0xff]
        %v900 = vld [vmem:[#allocation6 + $0x130] sm:$0xff]
        %v901 = vld [vmem:[#allocation6 + $0x150] sm:$0xff]
        %v902 = vld [vmem:[#allocation6 + $0x170] sm:$0xff]
        %v903 = vld [vmem:[#allocation6 + $0x190] sm:$0xff]
        %v904 = vld [vmem:[#allocation6 + $0x1b0] sm:$0xff]
        %v905 = vld [vmem:[#allocation6 + $0x1d0] sm:$0xff]
        %v906 = vld [vmem:[#allocation6 + $0x1f0] sm:$0xff]
        %v923 = vunpack.c.l.b16 %v891
        %v924 = vunpack.c.h.b16 %v891
        %v925 = vunpack.c.l.b16 %v892
        %v926 = vunpack.c.h.b16 %v892
        %v927 = vunpack.c.l.b16 %v893
        %v928 = vunpack.c.h.b16 %v893
        %v929 = vunpack.c.l.b16 %v894
        %v930 = vunpack.c.h.b16 %v894
        %v931 = vunpack.c.l.b16 %v895
        %v932 = vunpack.c.h.b16 %v895
        %v933 = vunpack.c.l.b16 %v896
        %v934 = vunpack.c.h.b16 %v896
        %v935 = vunpack.c.l.b16 %v897
        %v936 = vunpack.c.h.b16 %v897
        %v937 = vunpack.c.l.b16 %v898
        %v938 = vunpack.c.h.b16 %v898
        %v939 = vunpack.c.l.b16 %v899
        %v940 = vunpack.c.h.b16 %v899
        %v941 = vunpack.c.l.b16 %v900
        %v942 = vunpack.c.h.b16 %v900
        %v943 = vunpack.c.l.b16 %v901
        %v944 = vunpack.c.h.b16 %v901
        %v945 = vunpack.c.l.b16 %v902
        %v946 = vunpack.c.h.b16 %v902
        %v947 = vunpack.c.l.b16 %v903
        %v948 = vunpack.c.h.b16 %v903
        %v949 = vunpack.c.l.b16 %v904
        %v950 = vunpack.c.h.b16 %v904
        %v951 = vunpack.c.l.b16 %v905
        %v952 = vunpack.c.h.b16 %v905
        %v953 = vunpack.c.l.b16 %v906
        %v954 = vunpack.c.h.b16 %v906
        %v955 = vpack.c.b16 %v925, %v923
        %v956 = vpack.c.b16 %v926, %v924
        %v957 = vpack.c.b16 %v929, %v927
        %v958 = vpack.c.b16 %v930, %v928
        %v959 = vpack.c.b16 %v933, %v931
        %v960 = vpack.c.b16 %v934, %v932
        %v961 = vpack.c.b16 %v937, %v935
        %v962 = vpack.c.b16 %v938, %v936
        %v963 = vpack.c.b16 %v941, %v939
        %v964 = vpack.c.b16 %v942, %v940
        %v965 = vpack.c.b16 %v945, %v943
        %v966 = vpack.c.b16 %v946, %v944
        %v967 = vpack.c.b16 %v949, %v947
        %v968 = vpack.c.b16 %v950, %v948
        %v969 = vpack.c.b16 %v953, %v951
        %v970 = vpack.c.b16 %v954, %v952
        %987 = vmatprep.subr.bf16.mxu0 %v956
        %988 = vmatpush1.bf16.msra.mxu0 %v955
        %989 = vmatprep.subr.bf16.mxu0 %v958
        %990 = vmatpush1.bf16.msra.mxu0 %v957
        %991 = vmatprep.subr.bf16.mxu0 %v960
        %992 = vmatpush1.bf16.msra.mxu0 %v959
        %993 = vmatprep.subr.bf16.mxu0 %v962
        %994 = vmatpush1.bf16.msra.mxu0 %v961
        %995 = vmatprep.subr.bf16.mxu0 %v964
        %996 = vmatpush1.bf16.msra.mxu0 %v963
        %997 = vmatprep.subr.bf16.mxu0 %v966
        %998 = vmatpush1.bf16.msra.mxu0 %v965
        %999 = vmatprep.subr.bf16.mxu0 %v968
        %1000 = vmatpush1.bf16.msra.mxu0 %v967
        %1001 = vmatprep.subr.bf16.mxu0 %v970
        %1002 = vmatpush1.bf16.msra.mxu0 %v969
        %1003 = vmatprep.subr.bf16.mxu0 0
        %1004 = vmatpush1.bf16.msra.mxu0 0
        %1005 = vmatprep.subr.bf16.mxu0 0
        %1006 = vmatpush1.bf16.msra.mxu0 0
        %1007 = vmatprep.subr.bf16.mxu0 0
        %1008 = vmatpush1.bf16.msra.mxu0 0
        %1009 = vmatprep.subr.bf16.mxu0 0
        %1010 = vmatpush1.bf16.msra.mxu0 0
        %1011 = vmatprep.subr.bf16.mxu0 0
        %1012 = vmatpush1.bf16.msra.mxu0 0
        %1013 = vmatprep.subr.bf16.mxu0 0
        %1014 = vmatpush1.bf16.msra.mxu0 0
        %1015 = vmatprep.subr.bf16.mxu0 0
        %1016 = vmatpush1.bf16.msra.mxu0 0
        %1017 = vmatprep.subr.bf16.mxu0 0
        %1018 = vmatpush1.bf16.msra.mxu0 0
        %1019 = vmatprep.mubr.bf16.mxu0 0
        %1020 = vmatmul.mubr.bf16.gmra.mrb[0].mxu0 %v538
        %v1021 = vpop.f32.mrb[0].mxu0
        %v1022 = vadd.f32 0.0, %v1021
        %v1023 = vpop.f32.mrb[0].mxu0
        %v1024 = vadd.f32 0.0, %v1023
        %v1025 = vpop.f32.mrb[0].mxu0
        %v1026 = vadd.f32 0.0, %v1025
        %v1027 = vpop.f32.mrb[0].mxu0
        %v1028 = vadd.f32 0.0, %v1027
        %1029 = vdwg.mxu0
        %v1030 = vld [vmem:[#allocation2 + $0x4] sm:$0x3]
        %v1031 = vmax.f32 %v1022, %v1026
        %v1032 = vrot.slane %v1031, 4
        %v1033 = vmax.f32 %v1031, %v1032
        %v1034 = vrot.slane %v1033, 2
        %v1035 = vmax.f32 %v1033, %v1034
        %v1036 = vrot.slane %v1035, 1
        %v1037 = vmax.f32 %v1035, %v1036
        %v1038 = vmax.f32 %v1024, %v1028
        %v1039 = vrot.slane %v1038, 4
        %v1040 = vmax.f32 %v1038, %v1039
        %v1041 = vrot.slane %v1040, 2
        %v1042 = vmax.f32 %v1040, %v1041
        %v1043 = vrot.slane %v1042, 1
        %v1044 = vmax.f32 %v1042, %v1043
        %v1047 = vcombine.low %v1037, %v1044
        %v1049 = vunpack.c.l.s4 1966171168
        %v1050 = vunpack.c.0.s8 %v1049
        %v1051 = vlaneseq
        %v1052 = vshrl.u32 %v1051, 7
        %v1053 = vsub.s32 %v1050, %v1052
        %v1054 = vrot.slane %v1047, %v1053
        %v1056 = vunpack.c.l.s4 1966171168
        %v1057 = vunpack.c.0.s8 %v1056
        %v1058 = vlaneseq
        %v1059 = vshrl.u32 %v1058, 7
        %v1060 = vsub.s32 %v1057, %v1059
        %v1061 = vrot.slane %v1054, %v1060
        %v1063 = vmax.f32 %v1030, %v1061
        %1064 = vst.msk [vmem:[#allocation2 + $0x4] sm:$0x3] %vm715, %v1063
        %v1065 = vld [vmem:[#allocation6 + $0x18] sm:$0xff]
        %v1066 = vld [vmem:[#allocation6 + $0x38] sm:$0xff]
        %v1067 = vld [vmem:[#allocation6 + $0x58] sm:$0xff]
        %v1068 = vld [vmem:[#allocation6 + $0x78] sm:$0xff]
        %v1069 = vld [vmem:[#allocation6 + $0x98] sm:$0xff]
        %v1070 = vld [vmem:[#allocation6 + $0xb8] sm:$0xff]
        %v1071 = vld [vmem:[#allocation6 + $0xd8] sm:$0xff]
        %v1072 = vld [vmem:[#allocation6 + $0xf8] sm:$0xff]
        %v1073 = vld [vmem:[#allocation6 + $0x118] sm:$0xff]
        %v1074 = vld [vmem:[#allocation6 + $0x138] sm:$0xff]
        %v1075 = vld [vmem:[#allocation6 + $0x158] sm:$0xff]
        %v1076 = vld [vmem:[#allocation6 + $0x178] sm:$0xff]
        %v1077 = vld [vmem:[#allocation6 + $0x198] sm:$0xff]
        %v1078 = vld [vmem:[#allocation6 + $0x1b8] sm:$0xff]
        %v1079 = vld [vmem:[#allocation6 + $0x1d8] sm:$0xff]
        %v1080 = vld [vmem:[#allocation6 + $0x1f8] sm:$0xff]
        %v1097 = vunpack.c.l.b16 %v1065
        %v1098 = vunpack.c.h.b16 %v1065
        %v1099 = vunpack.c.l.b16 %v1066
        %v1100 = vunpack.c.h.b16 %v1066
        %v1101 = vunpack.c.l.b16 %v1067
        %v1102 = vunpack.c.h.b16 %v1067
        %v1103 = vunpack.c.l.b16 %v1068
        %v1104 = vunpack.c.h.b16 %v1068
        %v1105 = vunpack.c.l.b16 %v1069
        %v1106 = vunpack.c.h.b16 %v1069
        %v1107 = vunpack.c.l.b16 %v1070
        %v1108 = vunpack.c.h.b16 %v1070
        %v1109 = vunpack.c.l.b16 %v1071
        %v1110 = vunpack.c.h.b16 %v1071
        %v1111 = vunpack.c.l.b16 %v1072
        %v1112 = vunpack.c.h.b16 %v1072
        %v1113 = vunpack.c.l.b16 %v1073
        %v1114 = vunpack.c.h.b16 %v1073
        %v1115 = vunpack.c.l.b16 %v1074
        %v1116 = vunpack.c.h.b16 %v1074
        %v1117 = vunpack.c.l.b16 %v1075
        %v1118 = vunpack.c.h.b16 %v1075
        %v1119 = vunpack.c.l.b16 %v1076
        %v1120 = vunpack.c.h.b16 %v1076
        %v1121 = vunpack.c.l.b16 %v1077
        %v1122 = vunpack.c.h.b16 %v1077
        %v1123 = vunpack.c.l.b16 %v1078
        %v1124 = vunpack.c.h.b16 %v1078
        %v1125 = vunpack.c.l.b16 %v1079
        %v1126 = vunpack.c.h.b16 %v1079
        %v1127 = vunpack.c.l.b16 %v1080
        %v1128 = vunpack.c.h.b16 %v1080
        %v1129 = vpack.c.b16 %v1099, %v1097
        %v1130 = vpack.c.b16 %v1100, %v1098
        %v1131 = vpack.c.b16 %v1103, %v1101
        %v1132 = vpack.c.b16 %v1104, %v1102
        %v1133 = vpack.c.b16 %v1107, %v1105
        %v1134 = vpack.c.b16 %v1108, %v1106
        %v1135 = vpack.c.b16 %v1111, %v1109
        %v1136 = vpack.c.b16 %v1112, %v1110
        %v1137 = vpack.c.b16 %v1115, %v1113
        %v1138 = vpack.c.b16 %v1116, %v1114
        %v1139 = vpack.c.b16 %v1119, %v1117
        %v1140 = vpack.c.b16 %v1120, %v1118
        %v1141 = vpack.c.b16 %v1123, %v1121
        %v1142 = vpack.c.b16 %v1124, %v1122
        %v1143 = vpack.c.b16 %v1127, %v1125
        %v1144 = vpack.c.b16 %v1128, %v1126
        %1161 = vmatprep.subr.bf16.mxu0 %v1130
        %1162 = vmatpush1.bf16.msra.mxu0 %v1129
        %1163 = vmatprep.subr.bf16.mxu0 %v1132
        %1164 = vmatpush1.bf16.msra.mxu0 %v1131
        %1165 = vmatprep.subr.bf16.mxu0 %v1134
        %1166 = vmatpush1.bf16.msra.mxu0 %v1133
        %1167 = vmatprep.subr.bf16.mxu0 %v1136
        %1168 = vmatpush1.bf16.msra.mxu0 %v1135
        %1169 = vmatprep.subr.bf16.mxu0 %v1138
        %1170 = vmatpush1.bf16.msra.mxu0 %v1137
        %1171 = vmatprep.subr.bf16.mxu0 %v1140
        %1172 = vmatpush1.bf16.msra.mxu0 %v1139
        %1173 = vmatprep.subr.bf16.mxu0 %v1142
        %1174 = vmatpush1.bf16.msra.mxu0 %v1141
        %1175 = vmatprep.subr.bf16.mxu0 %v1144
        %1176 = vmatpush1.bf16.msra.mxu0 %v1143
        %1177 = vmatprep.subr.bf16.mxu0 0
        %1178 = vmatpush1.bf16.msra.mxu0 0
        %1179 = vmatprep.subr.bf16.mxu0 0
        %1180 = vmatpush1.bf16.msra.mxu0 0
        %1181 = vmatprep.subr.bf16.mxu0 0
        %1182 = vmatpush1.bf16.msra.mxu0 0
        %1183 = vmatprep.subr.bf16.mxu0 0
        %1184 = vmatpush1.bf16.msra.mxu0 0
        %1185 = vmatprep.subr.bf16.mxu0 0
        %1186 = vmatpush1.bf16.msra.mxu0 0
        %1187 = vmatprep.subr.bf16.mxu0 0
        %1188 = vmatpush1.bf16.msra.mxu0 0
        %1189 = vmatprep.subr.bf16.mxu0 0
        %1190 = vmatpush1.bf16.msra.mxu0 0
        %1191 = vmatprep.subr.bf16.mxu0 0
        %1192 = vmatpush1.bf16.msra.mxu0 0
        %1193 = vmatprep.mubr.bf16.mxu0 0
        %1194 = vmatmul.mubr.bf16.gmra.mrb[0].mxu0 %v538
        %v1195 = vpop.f32.mrb[0].mxu0
        %v1196 = vadd.f32 0.0, %v1195
        %v1197 = vpop.f32.mrb[0].mxu0
        %v1198 = vadd.f32 0.0, %v1197
        %v1199 = vpop.f32.mrb[0].mxu0
        %v1200 = vadd.f32 0.0, %v1199
        %v1201 = vpop.f32.mrb[0].mxu0
        %v1202 = vadd.f32 0.0, %v1201
        %1203 = vdwg.mxu0
        %v1204 = vld [vmem:[#allocation2 + $0x6] sm:$0x3]
        %v1205 = vmax.f32 %v1196, %v1200
        %v1206 = vrot.slane %v1205, 4
        %v1207 = vmax.f32 %v1205, %v1206
        %v1208 = vrot.slane %v1207, 2
        %v1209 = vmax.f32 %v1207, %v1208
        %v1210 = vrot.slane %v1209, 1
        %v1211 = vmax.f32 %v1209, %v1210
        %v1212 = vmax.f32 %v1198, %v1202
        %v1213 = vrot.slane %v1212, 4
        %v1214 = vmax.f32 %v1212, %v1213
        %v1215 = vrot.slane %v1214, 2
        %v1216 = vmax.f32 %v1214, %v1215
        %v1217 = vrot.slane %v1216, 1
        %v1218 = vmax.f32 %v1216, %v1217
        %v1221 = vcombine.low %v1211, %v1218
        %v1223 = vunpack.c.l.s4 1966171168
        %v1224 = vunpack.c.0.s8 %v1223
        %v1225 = vlaneseq
        %v1226 = vshrl.u32 %v1225, 7
        %v1227 = vsub.s32 %v1224, %v1226
        %v1228 = vrot.slane %v1221, %v1227
        %v1230 = vunpack.c.l.s4 1966171168
        %v1231 = vunpack.c.0.s8 %v1230
        %v1232 = vlaneseq
        %v1233 = vshrl.u32 %v1232, 7
        %v1234 = vsub.s32 %v1231, %v1233
        %v1235 = vrot.slane %v1228, %v1234
        %v1237 = vmax.f32 %v1204, %v1235
        %1238 = vst.msk [vmem:[#allocation2 + $0x6] sm:$0x3] %vm715, %v1237
        // Predicated region
        $region61: #{tpu_custom_call.1} parent=47 // pred_check
          %p1239 = pneg %p352
        $region62: #{tpu_custom_call.1} parent=47 // pred_check_branch
          %1241 = sbr.rel (%p1239) target = $region64
        $region63: #{tpu_custom_call.1} parent=47 // pred_region
          %v1242 = vld [vmem:[#allocation2] sm:$0xff]
          %v1243 = vld [vmem:[%s6] sm:$0xff]
          %v1244 = vadd.f32 %v1242, %v1243
          %v1245 = vmax.f32 %v1244, 0.0
          %1246 = vst [vmem:[%s338] sm:$0xff] %v1245
        $region64: #{tpu_custom_call.1} parent=47 // pred_fallthru
          _
        %s1247 = sand.u32 %s208, 1
        %s1248 = scalar_lea.sflag [#allocation5], %s1247
        %s1249 = sand.u32 %s208, 1
        %s1250 = smul.addr %s1249, 8
        %s1251 = scalar_lea.vmem [#allocation8], %s1250
        // Predicated region
        $region65: #{tpu_custom_call.1} parent=47 // pred_check
          %p1252 = pneg %p218
        $region66: #{tpu_custom_call.1} parent=47 // pred_check_branch
          %1254 = sbr.rel (%p1252) target = $region68
        $region67: #{tpu_custom_call.1} parent=47 // pred_region
          %s1256 = ssub.s32 128, 128
          %1257 = vsyncadd %s1248, %s1256
          %s1258 = smul.addr %s29, 8
          %s1259 = smul.addr %s28, 8
          %s1260 = sadd.s32 %s1258, %s1259
          %s1261 = smul.addr %s1260, 16
          %s1262 = scalar_lea.hbm %s7, %s1261
          %s1264 = sshll.u32 %s1251, 4
          %s1265 = int_to_ptr.vmem [resolvable:$true] %s1264
          %1267 = dma.vmem_to_hbm [thread:$0]  %s1265, 128, %s1262, %s1248
        $region68: #{tpu_custom_call.1} parent=47 // pred_fallthru
          _
      $region48: #{tpu_custom_call.1} parent=5 // pred_fallthru
        _
      %p1268 = scmp.le.s32.totalorder 2, %s18
      // Predicated region
      $region69: #{tpu_custom_call.1} parent=5 // pred_check
        %p1269 = pneg %p1268
      $region70: #{tpu_custom_call.1} parent=5 // pred_check_branch
        %1271 = sbr.rel (%p1269) target = $region72
      $region71: #{tpu_custom_call.1} parent=5 // pred_region
        %s1272 = ssub.s32 %s18, 2
        // Predicated region
        $region73: #{tpu_custom_call.1} parent=71 // pred_check
          %p1273 = pneg %p224
        $region74: #{tpu_custom_call.1} parent=71 // pred_check_branch
          %1275 = sbr.rel (%p1273) target = $region76
        $region75: #{tpu_custom_call.1} parent=71 // pred_region
          %s1276 = sand.u32 %s209, 1
          %s1277 = scalar_lea.sflag [#allocation5], %s1276
          %s1278 = sand.u32 %s209, 1
          %s1279 = smul.addr %s1278, 8
          %s1280 = scalar_lea.vmem [#allocation8], %s1279
          %1281 = dma.done %s1277, 128
        $region76: #{tpu_custom_call.1} parent=71 // pred_fallthru
          _
      $region72: #{tpu_custom_call.1} parent=5 // pred_fallthru
        _
    $region6: #{tpu_custom_call.1} parent=1 // loop_footer
      %s22 = sadd.s32 1, %s18
    $region7: #{tpu_custom_call.1} parent=1 // loop_footer_branch
      %17 = sbr.rel target = $region3
    $region8: #{tpu_custom_call.1} parent=1 // loop_exit
      _
    %1282 = vsyncpa [#allocation4], 1
    %s1283 = scalar_lea.sflag [#allocation4], 1
    %1284 = vsyncpa %s1283, 1
    %1285 = vsyncpa [#allocation7], 1
    %1286 = vsyncpa [#allocation5], 1
    %s1287 = scalar_lea.sflag [#allocation5], 1
    %1288 = vsyncpa %s1287, 1

</llo_original>
